<compile_context>
chip_gen: v7x
topology: tpu7x:2x2x1
jax: 0.10.0
libtpu: 0.0.40
codegen_flags: <defaults>
</compile_context>

<pallas_src>
import math

import jax
import jax.numpy as jnp
from jax import lax
from jax.experimental import pallas as pl
from jax.experimental.pallas import tpu as pltpu

IN_FEATURES = 784
NUM_CLASSES = 10
LANE = 128
LAYER_SIZES = [(784, 256), (256, 256), (256, 256), (256, 128), (128, 128), (128, 10)]


def _round_up(x, m):
    return (x + m - 1) // m * m


def _cdiv(a, b):
    return (a + b - 1) // b


def _mlp_kernel(x_ref,
                w1_ref, b1_ref, w2_ref, b2_ref, w3_ref, b3_ref,
                w4_ref, b4_ref, w5_ref, b5_ref, w6_ref, b6_ref,
                o_ref):
    """One batch tile: 6 fused matmuls (bf16 in, f32 acc) + log_softmax epilogue."""
    # x arrives as f32 (tb, 784); cast to bf16 in-kernel (native MXU input path).
    h = x_ref[...].astype(jnp.bfloat16)

    def linear_relu(h, w_ref, b_ref):
        acc = jnp.dot(h, w_ref[...], preferred_element_type=jnp.float32) + b_ref[...]
        return jnp.maximum(acc, 0.0).astype(jnp.bfloat16)

    h = linear_relu(h, w1_ref, b1_ref)
    h = linear_relu(h, w2_ref, b2_ref)
    h = linear_relu(h, w3_ref, b3_ref)
    h = linear_relu(h, w4_ref, b4_ref)
    h = linear_relu(h, w5_ref, b5_ref)
    # F.dropout(x, training=self.training): inference path -> identity.
    # TODO(synk): training-mode dropout (pltpu.prng_random_bits mask) not emitted.

    # Final layer in f32; class axis is zero-padded 10 -> 128 for lane-dense stores.
    logits = jnp.dot(h, w6_ref[...], preferred_element_type=jnp.float32) + b6_ref[...]
    lane = lax.broadcasted_iota(jnp.int32, logits.shape, dimension=1)
    logits = jnp.where(lane < NUM_CLASSES, logits, -1e30)

    # log_softmax over the class axis (EUP exp + XLU reductions; padded lanes ~ 0 weight).
    m = jnp.max(logits, axis=-1, keepdims=True)
    lse = m + jnp.log(jnp.sum(jnp.exp(logits - m), axis=-1, keepdims=True))
    # bf16 store halves output HBM traffic; ~3 decimal digits of log-prob precision
    # (fine for classification / argmax use).
    o_ref[...] = (logits - lse).astype(o_ref.dtype)


def init_params(key):
    """PyTorch nn.Linear default init (U[-1/sqrt(in), 1/sqrt(in)]), stored as (in, out)."""
    params = []
    for (fan_in, fan_out) in LAYER_SIZES:
        key, kw, kb = jax.random.split(key, 3)
        bound = 1.0 / math.sqrt(fan_in)
        w = jax.random.uniform(kw, (fan_in, fan_out), jnp.float32, -bound, bound)
        b = jax.random.uniform(kb, (1, fan_out), jnp.float32, -bound, bound)
        params.append((w, b))
    return params


def _prepare_params(params):
    """Pad only the output (lane) dim to a multiple of 128 where needed (fc6: 10->128).

    Input dims are left ragged (784 stays 784 -- full-dim blocks are layout-legal
    and avoid wasted K-padding). Weights are cast to bf16, biases stay f32.
    """
    prepared = []
    for (w, b) in params:
        fan_in, fan_out = w.shape
        out_pad = _round_up(fan_out, LANE)
        if out_pad != fan_out:
            w = jnp.pad(w, ((0, 0), (0, out_pad - fan_out)))
            b = jnp.pad(b, ((0, 0), (0, out_pad - fan_out)))
        prepared.append((w.astype(jnp.bfloat16), b.astype(jnp.float32)))
    return prepared


def net_forward(x, params, *, block_batch=1024):
    batch, feat = x.shape
    assert feat == IN_FEATURES
    prepared = _prepare_params(params)
    flat_params = [p for wb in prepared for p in wb]

    out_pad = _round_up(NUM_CLASSES, LANE)   # 128

    # Batch tile selection:
    #   * large batches: 1024-row tiles (amortize ~0.35us/step grid overhead)
    #   * mid batches:   split into >= 2 tiles so v7x's two TensorCores both work
    #   * tiny batches:  single full-dim block (always layout-legal, no padding)
    if batch >= 2 * block_batch:
        tb = block_batch
    elif batch > 32:
        tb = _round_up(_cdiv(batch, 2), 16)   # 16-row bf16 sublane packing
    else:
        tb = batch
    n_tiles = _cdiv(batch, tb)

    # Weights/biases: whole-array blocks with constant index maps -> fetched once,
    # VMEM-resident across all batch tiles.
    param_specs = []
    for (w, b) in prepared:
        param_specs.append(pl.BlockSpec(w.shape, lambda i: (0, 0)))
        param_specs.append(pl.BlockSpec(b.shape, lambda i: (0, 0)))

    out = pl.pallas_call(
        _mlp_kernel,
        out_shape=jax.ShapeDtypeStruct((batch, out_pad), jnp.bfloat16),
        grid=(n_tiles,),
        # x streamed directly from HBM (f32, ragged 784 last dim = full array dim).
        in_specs=[pl.BlockSpec((tb, IN_FEATURES), lambda i: (i, 0))] + param_specs,
        out_specs=pl.BlockSpec((tb, out_pad), lambda i: (i, 0)),
        compiler_params=pltpu.CompilerParams(
            dimension_semantics=("parallel",),
            vmem_limit_bytes=24 << 20,
        ),
    )(x, *flat_params)
    # Slice off the padded class lanes; return f32 log-probs (PyTorch-facing dtype).
    return out[:, :NUM_CLASSES].astype(jnp.float32)


def net_forward_ref(x, params):
    """Pure-JAX reference with matching bf16-weight / f32-accumulate numerics."""
    h = x.astype(jnp.bfloat16)
    for i, (w, b) in enumerate(params):
        h = jnp.dot(h, w.astype(jnp.bfloat16), preferred_element_type=jnp.float32) + b
        if i < 5:
            h = jnp.maximum(h, 0.0).astype(jnp.bfloat16)
    return jax.nn.log_softmax(h, axis=-1)


if __name__ == "__main__":
    key = jax.random.PRNGKey(0)
    kx, kp = jax.random.split(key)
    batch = 8
    x = jax.random.normal(kx, (batch, 784), jnp.float32)
    params = init_params(kp)

    out = jax.block_until_ready(net_forward(x, params))
    ref = net_forward_ref(x, params)

    assert out.shape == (batch, 10)
    assert bool(jnp.allclose(out, ref, atol=5e-2, rtol=2e-2)), "mismatch vs reference"
    print("KERNEL_OK")
</pallas_src>

<mosaic_0001>
module attributes {stable_mosaic.version = 11 : i64} {
  func.func @_mlp_kernel(%arg0: i32, %arg1: memref<8x784xf32, #tpu.memory_space<vmem>>, %arg2: memref<784x256xbf16, #tpu.memory_space<vmem>>, %arg3: memref<1x256xf32, #tpu.memory_space<vmem>>, %arg4: memref<256x256xbf16, #tpu.memory_space<vmem>>, %arg5: memref<1x256xf32, #tpu.memory_space<vmem>>, %arg6: memref<256x256xbf16, #tpu.memory_space<vmem>>, %arg7: memref<1x256xf32, #tpu.memory_space<vmem>>, %arg8: memref<256x128xbf16, #tpu.memory_space<vmem>>, %arg9: memref<1x128xf32, #tpu.memory_space<vmem>>, %arg10: memref<128x128xbf16, #tpu.memory_space<vmem>>, %arg11: memref<1x128xf32, #tpu.memory_space<vmem>>, %arg12: memref<128x128xbf16, #tpu.memory_space<vmem>>, %arg13: memref<1x128xf32, #tpu.memory_space<vmem>>, %arg14: memref<8x128xbf16, #tpu.memory_space<vmem>>) attributes {dimension_semantics = [#tpu.dimension_semantics<parallel>], iteration_bounds = array<i64: 1>, scalar_prefetch = 0 : i64, scratch_operands = 0 : i64, tpu.core_type = #tpu.core_type<tc>, window_params = [{transform_indices = @transform_0, window_bounds = array<i64: 8, 784>}, {pipeline_mode = #tpu.pipeline_mode<synchronous>, transform_indices = @transform_1, window_bounds = array<i64: 784, 256>}, {pipeline_mode = #tpu.pipeline_mode<synchronous>, transform_indices = @transform_2, window_bounds = array<i64: 1, 256>}, {pipeline_mode = #tpu.pipeline_mode<synchronous>, transform_indices = @transform_3, window_bounds = array<i64: 256, 256>}, {pipeline_mode = #tpu.pipeline_mode<synchronous>, transform_indices = @transform_4, window_bounds = array<i64: 1, 256>}, {pipeline_mode = #tpu.pipeline_mode<synchronous>, transform_indices = @transform_5, window_bounds = array<i64: 256, 256>}, {pipeline_mode = #tpu.pipeline_mode<synchronous>, transform_indices = @transform_6, window_bounds = array<i64: 1, 256>}, {pipeline_mode = #tpu.pipeline_mode<synchronous>, transform_indices = @transform_7, window_bounds = array<i64: 256, 128>}, {pipeline_mode = #tpu.pipeline_mode<synchronous>, transform_indices = @transform_8, window_bounds = array<i64: 1, 128>}, {pipeline_mode = #tpu.pipeline_mode<synchronous>, transform_indices = @transform_9, window_bounds = array<i64: 128, 128>}, {pipeline_mode = #tpu.pipeline_mode<synchronous>, transform_indices = @transform_10, window_bounds = array<i64: 1, 128>}, {pipeline_mode = #tpu.pipeline_mode<synchronous>, transform_indices = @transform_11, window_bounds = array<i64: 128, 128>}, {pipeline_mode = #tpu.pipeline_mode<synchronous>, transform_indices = @transform_12, window_bounds = array<i64: 1, 128>}, {transform_indices = @transform_13, window_bounds = array<i64: 8, 128>}]} {
    %c0 = arith.constant 0 : index
    %c0_0 = arith.constant 0 : index
    %0 = vector.load %arg1[%c0, %c0_0] : memref<8x784xf32, #tpu.memory_space<vmem>>, vector<8x784xf32>
    %1 = arith.truncf %0 : vector<8x784xf32> to vector<8x784xbf16>
    %c0_1 = arith.constant 0 : index
    %c0_2 = arith.constant 0 : index
    %2 = vector.load %arg2[%c0_1, %c0_2] : memref<784x256xbf16, #tpu.memory_space<vmem>>, vector<784x256xbf16>
    %cst = arith.constant dense<0.000000e+00> : vector<8x256xf32>
    %3 = tpu.matmul %1, %2, %cst {dimension_numbers = #tpu.dot_dimension_numbers<[1], [0], [0], [1], [0, 0, 1, 1], [], []>} : vector<8x784xbf16>, vector<784x256xbf16>, vector<8x256xf32> -> vector<8x256xf32>
    %c0_3 = arith.constant 0 : index
    %c0_4 = arith.constant 0 : index
    %4 = vector.load %arg3[%c0_3, %c0_4] : memref<1x256xf32, #tpu.memory_space<vmem>>, vector<1x256xf32>
    %5 = vector.broadcast %4 : vector<1x256xf32> to vector<8x256xf32>
    %6 = arith.addf %3, %5 : vector<8x256xf32>
    %cst_5 = arith.constant 0.000000e+00 : f32
    %7 = vector.broadcast %cst_5 : f32 to vector<8x256xf32>
    %8 = arith.maximumf %6, %7 : vector<8x256xf32>
    %9 = arith.truncf %8 : vector<8x256xf32> to vector<8x256xbf16>
    %c0_6 = arith.constant 0 : index
    %c0_7 = arith.constant 0 : index
    %10 = vector.load %arg4[%c0_6, %c0_7] : memref<256x256xbf16, #tpu.memory_space<vmem>>, vector<256x256xbf16>
    %cst_8 = arith.constant dense<0.000000e+00> : vector<8x256xf32>
    %11 = tpu.matmul %9, %10, %cst_8 {dimension_numbers = #tpu.dot_dimension_numbers<[1], [0], [0], [1], [0, 0, 1, 1], [], []>} : vector<8x256xbf16>, vector<256x256xbf16>, vector<8x256xf32> -> vector<8x256xf32>
    %c0_9 = arith.constant 0 : index
    %c0_10 = arith.constant 0 : index
    %12 = vector.load %arg5[%c0_9, %c0_10] : memref<1x256xf32, #tpu.memory_space<vmem>>, vector<1x256xf32>
    %13 = vector.broadcast %12 : vector<1x256xf32> to vector<8x256xf32>
    %14 = arith.addf %11, %13 : vector<8x256xf32>
    %cst_11 = arith.constant 0.000000e+00 : f32
    %15 = vector.broadcast %cst_11 : f32 to vector<8x256xf32>
    %16 = arith.maximumf %14, %15 : vector<8x256xf32>
    %17 = arith.truncf %16 : vector<8x256xf32> to vector<8x256xbf16>
    %c0_12 = arith.constant 0 : index
    %c0_13 = arith.constant 0 : index
    %18 = vector.load %arg6[%c0_12, %c0_13] : memref<256x256xbf16, #tpu.memory_space<vmem>>, vector<256x256xbf16>
    %cst_14 = arith.constant dense<0.000000e+00> : vector<8x256xf32>
    %19 = tpu.matmul %17, %18, %cst_14 {dimension_numbers = #tpu.dot_dimension_numbers<[1], [0], [0], [1], [0, 0, 1, 1], [], []>} : vector<8x256xbf16>, vector<256x256xbf16>, vector<8x256xf32> -> vector<8x256xf32>
    %c0_15 = arith.constant 0 : index
    %c0_16 = arith.constant 0 : index
    %20 = vector.load %arg7[%c0_15, %c0_16] : memref<1x256xf32, #tpu.memory_space<vmem>>, vector<1x256xf32>
    %21 = vector.broadcast %20 : vector<1x256xf32> to vector<8x256xf32>
    %22 = arith.addf %19, %21 : vector<8x256xf32>
    %cst_17 = arith.constant 0.000000e+00 : f32
    %23 = vector.broadcast %cst_17 : f32 to vector<8x256xf32>
    %24 = arith.maximumf %22, %23 : vector<8x256xf32>
    %25 = arith.truncf %24 : vector<8x256xf32> to vector<8x256xbf16>
    %c0_18 = arith.constant 0 : index
    %c0_19 = arith.constant 0 : index
    %26 = vector.load %arg8[%c0_18, %c0_19] : memref<256x128xbf16, #tpu.memory_space<vmem>>, vector<256x128xbf16>
    %cst_20 = arith.constant dense<0.000000e+00> : vector<8x128xf32>
    %27 = tpu.matmul %25, %26, %cst_20 {dimension_numbers = #tpu.dot_dimension_numbers<[1], [0], [0], [1], [0, 0, 1, 1], [], []>} : vector<8x256xbf16>, vector<256x128xbf16>, vector<8x128xf32> -> vector<8x128xf32>
    %c0_21 = arith.constant 0 : index
    %c0_22 = arith.constant 0 : index
    %28 = vector.load %arg9[%c0_21, %c0_22] : memref<1x128xf32, #tpu.memory_space<vmem>>, vector<1x128xf32>
    %29 = vector.broadcast %28 : vector<1x128xf32> to vector<8x128xf32>
    %30 = arith.addf %27, %29 : vector<8x128xf32>
    %cst_23 = arith.constant 0.000000e+00 : f32
    %31 = vector.broadcast %cst_23 : f32 to vector<8x128xf32>
    %32 = arith.maximumf %30, %31 : vector<8x128xf32>
    %33 = arith.truncf %32 : vector<8x128xf32> to vector<8x128xbf16>
    %c0_24 = arith.constant 0 : index
    %c0_25 = arith.constant 0 : index
    %34 = vector.load %arg10[%c0_24, %c0_25] : memref<128x128xbf16, #tpu.memory_space<vmem>>, vector<128x128xbf16>
    %cst_26 = arith.constant dense<0.000000e+00> : vector<8x128xf32>
    %35 = tpu.matmul %33, %34, %cst_26 {dimension_numbers = #tpu.dot_dimension_numbers<[1], [0], [0], [1], [0, 0, 1, 1], [], []>} : vector<8x128xbf16>, vector<128x128xbf16>, vector<8x128xf32> -> vector<8x128xf32>
    %c0_27 = arith.constant 0 : index
    %c0_28 = arith.constant 0 : index
    %36 = vector.load %arg11[%c0_27, %c0_28] : memref<1x128xf32, #tpu.memory_space<vmem>>, vector<1x128xf32>
    %37 = vector.broadcast %36 : vector<1x128xf32> to vector<8x128xf32>
    %38 = arith.addf %35, %37 : vector<8x128xf32>
    %cst_29 = arith.constant 0.000000e+00 : f32
    %39 = vector.broadcast %cst_29 : f32 to vector<8x128xf32>
    %40 = arith.maximumf %38, %39 : vector<8x128xf32>
    %41 = arith.truncf %40 : vector<8x128xf32> to vector<8x128xbf16>
    %c0_30 = arith.constant 0 : index
    %c0_31 = arith.constant 0 : index
    %42 = vector.load %arg12[%c0_30, %c0_31] : memref<128x128xbf16, #tpu.memory_space<vmem>>, vector<128x128xbf16>
    %cst_32 = arith.constant dense<0.000000e+00> : vector<8x128xf32>
    %43 = tpu.matmul %41, %42, %cst_32 {dimension_numbers = #tpu.dot_dimension_numbers<[1], [0], [0], [1], [0, 0, 1, 1], [], []>} : vector<8x128xbf16>, vector<128x128xbf16>, vector<8x128xf32> -> vector<8x128xf32>
    %c0_33 = arith.constant 0 : index
    %c0_34 = arith.constant 0 : index
    %44 = vector.load %arg13[%c0_33, %c0_34] : memref<1x128xf32, #tpu.memory_space<vmem>>, vector<1x128xf32>
    %45 = vector.broadcast %44 : vector<1x128xf32> to vector<8x128xf32>
    %46 = arith.addf %43, %45 : vector<8x128xf32>
    %47 = tpu.iota {dimensions = array<i32: 1>} : vector<8x128xi32>
    %c10_i32 = arith.constant 10 : i32
    %48 = vector.broadcast %c10_i32 : i32 to vector<8x128xi32>
    %49 = arith.cmpi slt, %47, %48 : vector<8x128xi32>
    %cst_35 = arith.constant -1.000000e+30 : f32
    %50 = vector.broadcast %cst_35 : f32 to vector<8x128xf32>
    %51 = arith.select %49, %46, %50 : vector<8x128xi1>, vector<8x128xf32>
    %cst_36 = arith.constant dense<0xFF800000> : vector<8xf32>
    %52 = vector.multi_reduction <maximumf>, %51, %cst_36 [1] : vector<8x128xf32> to vector<8xf32>
    %53 = vector.shape_cast %52 : vector<8xf32> to vector<8x1xf32>
    %54 = vector.broadcast %53 : vector<8x1xf32> to vector<8x128xf32>
    %55 = arith.subf %51, %54 : vector<8x128xf32>
    %56 = math.exp %55 : vector<8x128xf32>
    %cst_37 = arith.constant dense<0.000000e+00> : vector<8xf32>
    %57 = vector.multi_reduction <add>, %56, %cst_37 [1] : vector<8x128xf32> to vector<8xf32>
    %58 = vector.shape_cast %57 : vector<8xf32> to vector<8x1xf32>
    %59 = math.log %58 : vector<8x1xf32>
    %60 = arith.addf %53, %59 : vector<8x1xf32>
    %61 = vector.broadcast %60 : vector<8x1xf32> to vector<8x128xf32>
    %62 = arith.subf %51, %61 : vector<8x128xf32>
    %63 = arith.truncf %62 : vector<8x128xf32> to vector<8x128xbf16>
    %c0_38 = arith.constant 0 : index
    %c0_39 = arith.constant 0 : index
    %64 = vector.load %arg14[%c0_38, %c0_39] : memref<8x128xbf16, #tpu.memory_space<vmem>>, vector<8x128xbf16>
    tpu.vector_store %arg14[%c0_38, %c0_39], %63 {strides = array<i32>} : memref<8x128xbf16, #tpu.memory_space<vmem>>, vector<8x128xbf16>,
    return
  }
  func.func @transform_0(%arg0: i32) -> (i32, i32) {
    %c0_i32 = arith.constant 0 : i32
    %c0_i32_0 = arith.constant 0 : i32
    return %arg0, %c0_i32 : i32, i32
  }
  func.func @transform_1(%arg0: i32) -> (i32, i32) {
    %c0_i32 = arith.constant 0 : i32
    %c0_i32_0 = arith.constant 0 : i32
    %c0_i32_1 = arith.constant 0 : i32
    return %c0_i32, %c0_i32_0 : i32, i32
  }
  func.func @transform_2(%arg0: i32) -> (i32, i32) {
    %c0_i32 = arith.constant 0 : i32
    %c0_i32_0 = arith.constant 0 : i32
    %c0_i32_1 = arith.constant 0 : i32
    return %c0_i32, %c0_i32_0 : i32, i32
  }
  func.func @transform_3(%arg0: i32) -> (i32, i32) {
    %c0_i32 = arith.constant 0 : i32
    %c0_i32_0 = arith.constant 0 : i32
    %c0_i32_1 = arith.constant 0 : i32
    return %c0_i32, %c0_i32_0 : i32, i32
  }
  func.func @transform_4(%arg0: i32) -> (i32, i32) {
    %c0_i32 = arith.constant 0 : i32
    %c0_i32_0 = arith.constant 0 : i32
    %c0_i32_1 = arith.constant 0 : i32
    return %c0_i32, %c0_i32_0 : i32, i32
  }
  func.func @transform_5(%arg0: i32) -> (i32, i32) {
    %c0_i32 = arith.constant 0 : i32
    %c0_i32_0 = arith.constant 0 : i32
    %c0_i32_1 = arith.constant 0 : i32
    return %c0_i32, %c0_i32_0 : i32, i32
  }
  func.func @transform_6(%arg0: i32) -> (i32, i32) {
    %c0_i32 = arith.constant 0 : i32
    %c0_i32_0 = arith.constant 0 : i32
    %c0_i32_1 = arith.constant 0 : i32
    return %c0_i32, %c0_i32_0 : i32, i32
  }
  func.func @transform_7(%arg0: i32) -> (i32, i32) {
    %c0_i32 = arith.constant 0 : i32
    %c0_i32_0 = arith.constant 0 : i32
    %c0_i32_1 = arith.constant 0 : i32
    return %c0_i32, %c0_i32_0 : i32, i32
  }
  func.func @transform_8(%arg0: i32) -> (i32, i32) {
    %c0_i32 = arith.constant 0 : i32
    %c0_i32_0 = arith.constant 0 : i32
    %c0_i32_1 = arith.constant 0 : i32
    return %c0_i32, %c0_i32_0 : i32, i32
  }
  func.func @transform_9(%arg0: i32) -> (i32, i32) {
    %c0_i32 = arith.constant 0 : i32
    %c0_i32_0 = arith.constant 0 : i32
    %c0_i32_1 = arith.constant 0 : i32
    return %c0_i32, %c0_i32_0 : i32, i32
  }
  func.func @transform_10(%arg0: i32) -> (i32, i32) {
    %c0_i32 = arith.constant 0 : i32
    %c0_i32_0 = arith.constant 0 : i32
    %c0_i32_1 = arith.constant 0 : i32
    return %c0_i32, %c0_i32_0 : i32, i32
  }
  func.func @transform_11(%arg0: i32) -> (i32, i32) {
    %c0_i32 = arith.constant 0 : i32
    %c0_i32_0 = arith.constant 0 : i32
    %c0_i32_1 = arith.constant 0 : i32
    return %c0_i32, %c0_i32_0 : i32, i32
  }
  func.func @transform_12(%arg0: i32) -> (i32, i32) {
    %c0_i32 = arith.constant 0 : i32
    %c0_i32_0 = arith.constant 0 : i32
    %c0_i32_1 = arith.constant 0 : i32
    return %c0_i32, %c0_i32_0 : i32, i32
  }
  func.func @transform_13(%arg0: i32) -> (i32, i32) {
    %c0_i32 = arith.constant 0 : i32
    %c0_i32_0 = arith.constant 0 : i32
    return %arg0, %c0_i32 : i32, i32
  }
}

</mosaic_0001>

<llo_original>
// kernel: tpu_custom_call.1
$region0: #{tpu_custom_call.1}
  #allocation0 [shape = 'u32[]', space=smem, size = 0x4, offset = 0x4, fixed_abs, tag = 'smem constant byte address 0x4 - core index']
  #allocation1 [shape = 'u32[144,128]{1,0:T(1,128)}', space=vmem, size = 0x12000, scoped, tag = 'internal scratch']
  %s0 = inlined_call_operand.hbm [shape: f32[8,784], index: 0, kind: input, shape index: {}]
  %s1 = inlined_call_operand.hbm [shape: bf16[784,256], index: 1, kind: input, shape index: {}]
  %s2 = inlined_call_operand.vmem [shape: f32[1,256], index: 2, kind: input, shape index: {}]
  %s3 = inlined_call_operand.hbm [shape: bf16[256,256], index: 3, kind: input, shape index: {}]
  %s4 = inlined_call_operand.vmem [shape: f32[1,256], index: 4, kind: input, shape index: {}]
  %s5 = inlined_call_operand.hbm [shape: bf16[256,256], index: 5, kind: input, shape index: {}]
  %s6 = inlined_call_operand.vmem [shape: f32[1,256], index: 6, kind: input, shape index: {}]
  %s7 = inlined_call_operand.hbm [shape: bf16[256,128], index: 7, kind: input, shape index: {}]
  %s8 = inlined_call_operand.vmem [shape: f32[1,128], index: 8, kind: input, shape index: {}]
  %s9 = inlined_call_operand.hbm [shape: bf16[128,128], index: 9, kind: input, shape index: {}]
  %s10 = inlined_call_operand.vmem [shape: f32[1,128], index: 10, kind: input, shape index: {}]
  %s11 = inlined_call_operand.hbm [shape: bf16[128,128], index: 11, kind: input, shape index: {}]
  %s12 = inlined_call_operand.vmem [shape: f32[1,128], index: 12, kind: input, shape index: {}]
  %s13 = inlined_call_operand.hbm [shape: bf16[8,128], index: 13, kind: output, shape index: {}]
  %s14 = sld [smem:[#allocation0]]
  $region90: #{tpu_custom_call.1} parent=0
    _
  %s16 = ssub.s32 1, %s14
  %s17 = scalar_select 0, %s16, %s14
  $region1: #{tpu_custom_call.1} parent=0
    #allocation2 [shape = 'u8[28672]{0}', space=vmem, size = 0x7000, scoped, tag = 'input window, operand 0, single buffered']
    #allocation3 [shape = 's32[1]{0}', space=sflag, size = 0x4, scoped, tag = 'scoped memory for tpu_custom_call.1']
    #allocation4 [shape = 's32[1]{0}', space=sflag, size = 0x4, scoped, tag = 'scoped memory for tpu_custom_call.1']
    #allocation5 [shape = 'u8[401408]{0}', space=vmem, size = 0x62000, scoped, tag = 'input window, operand 1, single buffered']
    #allocation6 [shape = 's32[1]{0}', space=sflag, size = 0x4, scoped, tag = 'scoped memory for tpu_custom_call.1']
    #allocation7 [shape = 'u8[131072]{0}', space=vmem, size = 0x20000, scoped, tag = 'input window, operand 3, single buffered']
    #allocation8 [shape = 'u8[131072]{0}', space=vmem, size = 0x20000, scoped, tag = 'input window, operand 5, single buffered']
    #allocation9 [shape = 's32[1]{0}', space=sflag, size = 0x4, scoped, tag = 'scoped memory for tpu_custom_call.1']
    #allocation10 [shape = 'u8[65536]{0}', space=vmem, size = 0x10000, scoped, tag = 'input window, operand 7, single buffered']
    #allocation11 [shape = 'u8[32768]{0}', space=vmem, size = 0x8000, scoped, tag = 'input window, operand 9, single buffered']
    #allocation12 [shape = 's32[1]{0}', space=sflag, size = 0x4, scoped, tag = 'scoped memory for tpu_custom_call.1']
    #allocation13 [shape = 'u8[32768]{0}', space=vmem, size = 0x8000, scoped, tag = 'input window, operand 11, single buffered']
    #allocation14 [shape = 'u8[2048]{0}', space=vmem, size = 0x800, scoped, tag = 'output window, operand 0, single buffered']
    %18 = vsyncpa [#allocation3], 0
    %19 = vsyncpa [#allocation6], 0
    %20 = vsyncpa [#allocation9], 0
    %21 = vsyncpa [#allocation12], 0
    %22 = vsyncpa [#allocation4], 0
    // Predicated region
    $region2: #{tpu_custom_call.1} parent=1 // pred_check
      _
    $region3: #{tpu_custom_call.1} parent=1 // pred_check_branch
      %24 = sbr.rel (0) target = $region5
    $region4: #{tpu_custom_call.1} parent=1 // pred_region
      %s26 = ssub.s32 896, 896
      %27 = vsyncadd [#allocation3], %s26
      %s29 = sshll.u32 [#allocation2], 4
      %s30 = int_to_ptr.vmem [resolvable:$true] %s29
      %32 = dma.hbm_to_vmem [thread:$0]  %s0, 896, %s30, [#allocation3]
    $region5: #{tpu_custom_call.1} parent=1 // pred_fallthru
      _
    // Predicated region
    $region6: #{tpu_custom_call.1} parent=1 // pred_check
      _
    $region7: #{tpu_custom_call.1} parent=1 // pred_check_branch
      %34 = sbr.rel (0) target = $region9
    $region8: #{tpu_custom_call.1} parent=1 // pred_region
      %s36 = ssub.s32 12544, 12544
      %37 = vsyncadd [#allocation6], %s36
      %s38 = sshll.u32 [#allocation5], 4
      %s39 = int_to_ptr.vmem [resolvable:$true] %s38
      %44 = dma.hbm_to_vmem [thread:$0]  %s1, 12544, %s39, [#allocation6], 128, 128, 8
    $region9: #{tpu_custom_call.1} parent=1 // pred_fallthru
      _
    // Predicated region
    $region10: #{tpu_custom_call.1} parent=1 // pred_check
      _
    $region11: #{tpu_custom_call.1} parent=1 // pred_check_branch
      %46 = sbr.rel (0) target = $region13
    $region12: #{tpu_custom_call.1} parent=1 // pred_region
      _
    $region13: #{tpu_custom_call.1} parent=1 // pred_fallthru
      _
    // Predicated region
    $region14: #{tpu_custom_call.1} parent=1 // pred_check
      _
    $region15: #{tpu_custom_call.1} parent=1 // pred_check_branch
      %48 = sbr.rel (0) target = $region17
    $region16: #{tpu_custom_call.1} parent=1 // pred_region
      %s50 = ssub.s32 4096, 4096
      %51 = vsyncadd [#allocation6], %s50
      %s52 = sshll.u32 [#allocation7], 4
      %s53 = int_to_ptr.vmem [resolvable:$true] %s52
      %58 = dma.hbm_to_vmem [thread:$0]  %s3, 4096, %s53, [#allocation6], 128, 128, 8
    $region17: #{tpu_custom_call.1} parent=1 // pred_fallthru
      _
    // Predicated region
    $region18: #{tpu_custom_call.1} parent=1 // pred_check
      _
    $region19: #{tpu_custom_call.1} parent=1 // pred_check_branch
      %60 = sbr.rel (0) target = $region21
    $region20: #{tpu_custom_call.1} parent=1 // pred_region
      _
    $region21: #{tpu_custom_call.1} parent=1 // pred_fallthru
      _
    // Predicated region
    $region22: #{tpu_custom_call.1} parent=1 // pred_check
      _
    $region23: #{tpu_custom_call.1} parent=1 // pred_check_branch
      %62 = sbr.rel (0) target = $region25
    $region24: #{tpu_custom_call.1} parent=1 // pred_region
      %s64 = ssub.s32 4096, 4096
      %65 = vsyncadd [#allocation9], %s64
      %s66 = sshll.u32 [#allocation8], 4
      %s67 = int_to_ptr.vmem [resolvable:$true] %s66
      %72 = dma.hbm_to_vmem [thread:$0]  %s5, 4096, %s67, [#allocation9], 128, 128, 8
    $region25: #{tpu_custom_call.1} parent=1 // pred_fallthru
      _
    // Predicated region
    $region26: #{tpu_custom_call.1} parent=1 // pred_check
      _
    $region27: #{tpu_custom_call.1} parent=1 // pred_check_branch
      %74 = sbr.rel (0) target = $region29
    $region28: #{tpu_custom_call.1} parent=1 // pred_region
      _
    $region29: #{tpu_custom_call.1} parent=1 // pred_fallthru
      _
    // Predicated region
    $region30: #{tpu_custom_call.1} parent=1 // pred_check
      _
    $region31: #{tpu_custom_call.1} parent=1 // pred_check_branch
      %76 = sbr.rel (0) target = $region33
    $region32: #{tpu_custom_call.1} parent=1 // pred_region
      %s78 = ssub.s32 2048, 2048
      %79 = vsyncadd [#allocation9], %s78
      %s80 = sshll.u32 [#allocation10], 4
      %s81 = int_to_ptr.vmem [resolvable:$true] %s80
      %86 = dma.hbm_to_vmem [thread:$0]  %s7, 2048, %s81, [#allocation9], 64, 64, 4
    $region33: #{tpu_custom_call.1} parent=1 // pred_fallthru
      _
    // Predicated region
    $region34: #{tpu_custom_call.1} parent=1 // pred_check
      _
    $region35: #{tpu_custom_call.1} parent=1 // pred_check_branch
      %88 = sbr.rel (0) target = $region37
    $region36: #{tpu_custom_call.1} parent=1 // pred_region
      _
    $region37: #{tpu_custom_call.1} parent=1 // pred_fallthru
      _
    // Predicated region
    $region38: #{tpu_custom_call.1} parent=1 // pred_check
      _
    $region39: #{tpu_custom_call.1} parent=1 // pred_check_branch
      %90 = sbr.rel (0) target = $region41
    $region40: #{tpu_custom_call.1} parent=1 // pred_region
      %s92 = ssub.s32 1024, 1024
      %93 = vsyncadd [#allocation12], %s92
      %s94 = sshll.u32 [#allocation11], 4
      %s95 = int_to_ptr.vmem [resolvable:$true] %s94
      %100 = dma.hbm_to_vmem [thread:$0]  %s9, 1024, %s95, [#allocation12], 64, 64, 4
    $region41: #{tpu_custom_call.1} parent=1 // pred_fallthru
      _
    // Predicated region
    $region42: #{tpu_custom_call.1} parent=1 // pred_check
      _
    $region43: #{tpu_custom_call.1} parent=1 // pred_check_branch
      %102 = sbr.rel (0) target = $region45
    $region44: #{tpu_custom_call.1} parent=1 // pred_region
      _
    $region45: #{tpu_custom_call.1} parent=1 // pred_fallthru
      _
    // Predicated region
    $region46: #{tpu_custom_call.1} parent=1 // pred_check
      _
    $region47: #{tpu_custom_call.1} parent=1 // pred_check_branch
      %104 = sbr.rel (0) target = $region49
    $region48: #{tpu_custom_call.1} parent=1 // pred_region
      %s106 = ssub.s32 1024, 1024
      %107 = vsyncadd [#allocation12], %s106
      %s108 = sshll.u32 [#allocation13], 4
      %s109 = int_to_ptr.vmem [resolvable:$true] %s108
      %114 = dma.hbm_to_vmem [thread:$0]  %s11, 1024, %s109, [#allocation12], 64, 64, 4
    $region49: #{tpu_custom_call.1} parent=1 // pred_fallthru
      _
    // Predicated region
    $region50: #{tpu_custom_call.1} parent=1 // pred_check
      _
    $region51: #{tpu_custom_call.1} parent=1 // pred_check_branch
      %116 = sbr.rel (0) target = $region53
    $region52: #{tpu_custom_call.1} parent=1 // pred_region
      _
    $region53: #{tpu_custom_call.1} parent=1 // pred_fallthru
      _
    // Predicated region
    $region54: #{tpu_custom_call.1} parent=1 // pred_check
      _
    $region55: #{tpu_custom_call.1} parent=1 // pred_check_branch
      %118 = sbr.rel (0) target = $region57
    $region56: #{tpu_custom_call.1} parent=1 // pred_region
      %119 = dma.done [#allocation3], 896
    $region57: #{tpu_custom_call.1} parent=1 // pred_fallthru
      _
    // Predicated region
    $region58: #{tpu_custom_call.1} parent=1 // pred_check
      _
    $region59: #{tpu_custom_call.1} parent=1 // pred_check_branch
      %121 = sbr.rel (0) target = $region61
    $region60: #{tpu_custom_call.1} parent=1 // pred_region
      %122 = dma.done [#allocation6], 12544
    $region61: #{tpu_custom_call.1} parent=1 // pred_fallthru
      _
    // Predicated region
    $region62: #{tpu_custom_call.1} parent=1 // pred_check
      _
    $region63: #{tpu_custom_call.1} parent=1 // pred_check_branch
      %124 = sbr.rel (0) target = $region65
    $region64: #{tpu_custom_call.1} parent=1 // pred_region
      %125 = dma.done [#allocation6], 4096
    $region65: #{tpu_custom_call.1} parent=1 // pred_fallthru
      _
    // Predicated region
    $region66: #{tpu_custom_call.1} parent=1 // pred_check
      _
    $region67: #{tpu_custom_call.1} parent=1 // pred_check_branch
      %127 = sbr.rel (0) target = $region69
    $region68: #{tpu_custom_call.1} parent=1 // pred_region
      %128 = dma.done [#allocation9], 4096
    $region69: #{tpu_custom_call.1} parent=1 // pred_fallthru
      _
    // Predicated region
    $region70: #{tpu_custom_call.1} parent=1 // pred_check
      _
    $region71: #{tpu_custom_call.1} parent=1 // pred_check_branch
      %130 = sbr.rel (0) target = $region73
    $region72: #{tpu_custom_call.1} parent=1 // pred_region
      %131 = dma.done [#allocation9], 2048
    $region73: #{tpu_custom_call.1} parent=1 // pred_fallthru
      _
    // Predicated region
    $region74: #{tpu_custom_call.1} parent=1 // pred_check
      _
    $region75: #{tpu_custom_call.1} parent=1 // pred_check_branch
      %133 = sbr.rel (0) target = $region77
    $region76: #{tpu_custom_call.1} parent=1 // pred_region
      %134 = dma.done [#allocation12], 1024
    $region77: #{tpu_custom_call.1} parent=1 // pred_fallthru
      _
    // Predicated region
    $region78: #{tpu_custom_call.1} parent=1 // pred_check
      _
    $region79: #{tpu_custom_call.1} parent=1 // pred_check_branch
      %136 = sbr.rel (0) target = $region81
    $region80: #{tpu_custom_call.1} parent=1 // pred_region
      %137 = dma.done [#allocation12], 1024
    $region81: #{tpu_custom_call.1} parent=1 // pred_fallthru
      _
    %v139 = vld [vmem:[#allocation2] sm:$0xff]
    %v140 = vld [vmem:[#allocation2 + $0x8] sm:$0xff]
    %v141 = vld [vmem:[#allocation2 + $0x10] sm:$0xff]
    %v142 = vld [vmem:[#allocation2 + $0x18] sm:$0xff]
    %v143 = vld [vmem:[#allocation2 + $0x20] sm:$0xff]
    %v144 = vld [vmem:[#allocation2 + $0x28] sm:$0xff]
    %v145 = vld [vmem:[#allocation2 + $0x30] sm:$0xff]
    %v146 = vpack.c.bf16 %v139, %v139
    %v147 = vpack.c.bf16 %v140, %v140
    %v148 = vpack.c.bf16 %v141, %v141
    %v149 = vpack.c.bf16 %v142, %v142
    %v150 = vpack.c.bf16 %v143, %v143
    %v151 = vpack.c.bf16 %v144, %v144
    %v152 = vpack.c.bf16 %v145, %v145
    %v153 = vld [vmem:[#allocation5] sm:$0xff]
    %v154 = vld [vmem:[#allocation5 + $0x8] sm:$0xff]
    %v155 = vld [vmem:[#allocation5 + $0x10] sm:$0xff]
    %v156 = vld [vmem:[#allocation5 + $0x18] sm:$0xff]
    %v157 = vld [vmem:[#allocation5 + $0x20] sm:$0xff]
    %v158 = vld [vmem:[#allocation5 + $0x28] sm:$0xff]
    %v159 = vld [vmem:[#allocation5 + $0x30] sm:$0xff]
    %v160 = vld [vmem:[#allocation5 + $0x38] sm:$0xff]
    %v161 = vld [vmem:[#allocation5 + $0x40] sm:$0xff]
    %v162 = vld [vmem:[#allocation5 + $0x48] sm:$0xff]
    %v163 = vld [vmem:[#allocation5 + $0x50] sm:$0xff]
    %v164 = vld [vmem:[#allocation5 + $0x58] sm:$0xff]
    %v165 = vld [vmem:[#allocation5 + $0x60] sm:$0xff]
    %v166 = vld [vmem:[#allocation5 + $0x68] sm:$0xff]
    %v167 = vld [vmem:[#allocation5 + $0x70] sm:$0xff]
    %v168 = vld [vmem:[#allocation5 + $0x78] sm:$0xff]
    %v169 = vld [vmem:[#allocation5 + $0x80] sm:$0xff]
    %v170 = vld [vmem:[#allocation5 + $0x88] sm:$0xff]
    %v171 = vld [vmem:[#allocation5 + $0x90] sm:$0xff]
    %v172 = vld [vmem:[#allocation5 + $0x98] sm:$0xff]
    %v173 = vld [vmem:[#allocation5 + $0xa0] sm:$0xff]
    %v174 = vld [vmem:[#allocation5 + $0xa8] sm:$0xff]
    %v175 = vld [vmem:[#allocation5 + $0xb0] sm:$0xff]
    %v176 = vld [vmem:[#allocation5 + $0xb8] sm:$0xff]
    %v177 = vld [vmem:[#allocation5 + $0xc0] sm:$0xff]
    %v178 = vld [vmem:[#allocation5 + $0xc8] sm:$0xff]
    %v179 = vld [vmem:[#allocation5 + $0xd0] sm:$0xff]
    %v180 = vld [vmem:[#allocation5 + $0xd8] sm:$0xff]
    %v181 = vld [vmem:[#allocation5 + $0xe0] sm:$0xff]
    %v182 = vld [vmem:[#allocation5 + $0xe8] sm:$0xff]
    %v183 = vld [vmem:[#allocation5 + $0xf0] sm:$0xff]
    %v184 = vld [vmem:[#allocation5 + $0xf8] sm:$0xff]
    %v185 = vld [vmem:[#allocation5 + $0x100] sm:$0xff]
    %v186 = vld [vmem:[#allocation5 + $0x108] sm:$0xff]
    %v187 = vld [vmem:[#allocation5 + $0x110] sm:$0xff]
    %v188 = vld [vmem:[#allocation5 + $0x118] sm:$0xff]
    %v189 = vld [vmem:[#allocation5 + $0x120] sm:$0xff]
    %v190 = vld [vmem:[#allocation5 + $0x128] sm:$0xff]
    %v191 = vld [vmem:[#allocation5 + $0x130] sm:$0xff]
    %v192 = vld [vmem:[#allocation5 + $0x138] sm:$0xff]
    %v193 = vld [vmem:[#allocation5 + $0x140] sm:$0xff]
    %v194 = vld [vmem:[#allocation5 + $0x148] sm:$0xff]
    %v195 = vld [vmem:[#allocation5 + $0x150] sm:$0xff]
    %v196 = vld [vmem:[#allocation5 + $0x158] sm:$0xff]
    %v197 = vld [vmem:[#allocation5 + $0x160] sm:$0xff]
    %v198 = vld [vmem:[#allocation5 + $0x168] sm:$0xff]
    %v199 = vld [vmem:[#allocation5 + $0x170] sm:$0xff]
    %v200 = vld [vmem:[#allocation5 + $0x178] sm:$0xff]
    %v201 = vld [vmem:[#allocation5 + $0x180] sm:$0xff]
    %v202 = vld [vmem:[#allocation5 + $0x188] sm:$0xff]
    %v203 = vld [vmem:[#allocation5 + $0x190] sm:$0xff]
    %v204 = vld [vmem:[#allocation5 + $0x198] sm:$0xff]
    %v205 = vld [vmem:[#allocation5 + $0x1a0] sm:$0xff]
    %v206 = vld [vmem:[#allocation5 + $0x1a8] sm:$0xff]
    %v207 = vld [vmem:[#allocation5 + $0x1b0] sm:$0xff]
    %v208 = vld [vmem:[#allocation5 + $0x1b8] sm:$0xff]
    %v209 = vld [vmem:[#allocation5 + $0x1c0] sm:$0xff]
    %v210 = vld [vmem:[#allocation5 + $0x1c8] sm:$0xff]
    %v211 = vld [vmem:[#allocation5 + $0x1d0] sm:$0xff]
    %v212 = vld [vmem:[#allocation5 + $0x1d8] sm:$0xff]
    %v213 = vld [vmem:[#allocation5 + $0x1e0] sm:$0xff]
    %v214 = vld [vmem:[#allocation5 + $0x1e8] sm:$0xff]
    %v215 = vld [vmem:[#allocation5 + $0x1f0] sm:$0xff]
    %v216 = vld [vmem:[#allocation5 + $0x1f8] sm:$0xff]
    %v217 = vld [vmem:[#allocation5 + $0x200] sm:$0xff]
    %v218 = vld [vmem:[#allocation5 + $0x208] sm:$0xff]
    %v219 = vld [vmem:[#allocation5 + $0x210] sm:$0xff]
    %v220 = vld [vmem:[#allocation5 + $0x218] sm:$0xff]
    %v221 = vld [vmem:[#allocation5 + $0x220] sm:$0xff]
    %v222 = vld [vmem:[#allocation5 + $0x228] sm:$0xff]
    %v223 = vld [vmem:[#allocation5 + $0x230] sm:$0xff]
    %v224 = vld [vmem:[#allocation5 + $0x238] sm:$0xff]
    %v225 = vld [vmem:[#allocation5 + $0x240] sm:$0xff]
    %v226 = vld [vmem:[#allocation5 + $0x248] sm:$0xff]
    %v227 = vld [vmem:[#allocation5 + $0x250] sm:$0xff]
    %v228 = vld [vmem:[#allocation5 + $0x258] sm:$0xff]
    %v229 = vld [vmem:[#allocation5 + $0x260] sm:$0xff]
    %v230 = vld [vmem:[#allocation5 + $0x268] sm:$0xff]
    %v231 = vld [vmem:[#allocation5 + $0x270] sm:$0xff]
    %v232 = vld [vmem:[#allocation5 + $0x278] sm:$0xff]
    %v233 = vld [vmem:[#allocation5 + $0x280] sm:$0xff]
    %v234 = vld [vmem:[#allocation5 + $0x288] sm:$0xff]
    %v235 = vld [vmem:[#allocation5 + $0x290] sm:$0xff]
    %v236 = vld [vmem:[#allocation5 + $0x298] sm:$0xff]
    %v237 = vld [vmem:[#allocation5 + $0x2a0] sm:$0xff]
    %v238 = vld [vmem:[#allocation5 + $0x2a8] sm:$0xff]
    %v239 = vld [vmem:[#allocation5 + $0x2b0] sm:$0xff]
    %v240 = vld [vmem:[#allocation5 + $0x2b8] sm:$0xff]
    %v241 = vld [vmem:[#allocation5 + $0x2c0] sm:$0xff]
    %v242 = vld [vmem:[#allocation5 + $0x2c8] sm:$0xff]
    %v243 = vld [vmem:[#allocation5 + $0x2d0] sm:$0xff]
    %v244 = vld [vmem:[#allocation5 + $0x2d8] sm:$0xff]
    %v245 = vld [vmem:[#allocation5 + $0x2e0] sm:$0xff]
    %v246 = vld [vmem:[#allocation5 + $0x2e8] sm:$0xff]
    %v247 = vld [vmem:[#allocation5 + $0x2f0] sm:$0xff]
    %v248 = vld [vmem:[#allocation5 + $0x2f8] sm:$0xff]
    %v249 = vld [vmem:[#allocation5 + $0x300] sm:$0xff]
    %v250 = vld [vmem:[#allocation5 + $0x308] sm:$0xff]
    %v251 = vld [vmem:[%s2] sm:$0x3]
    %v253 = vlaneseq
    %v254 = vshrl.u32 %v253, 7
    %v255 = vsub.s32 0, %v254
    %v256 = vrot.slane %v251, %v255
    %v257 = vlaneseq
    %v258 = vshrl.u32 %v257, 7
    %v259 = vsub.s32 1, %v258
    %v260 = vrot.slane %v251, %v259
    %v361 = vunpack.c.l.b16 %v153
    %v362 = vunpack.c.h.b16 %v153
    %v363 = vunpack.c.l.b16 %v154
    %v364 = vunpack.c.h.b16 %v154
    %v365 = vunpack.c.l.b16 %v155
    %v366 = vunpack.c.h.b16 %v155
    %v367 = vunpack.c.l.b16 %v156
    %v368 = vunpack.c.h.b16 %v156
    %v369 = vunpack.c.l.b16 %v157
    %v370 = vunpack.c.h.b16 %v157
    %v371 = vunpack.c.l.b16 %v158
    %v372 = vunpack.c.h.b16 %v158
    %v373 = vunpack.c.l.b16 %v159
    %v374 = vunpack.c.h.b16 %v159
    %v375 = vunpack.c.l.b16 %v160
    %v376 = vunpack.c.h.b16 %v160
    %v377 = vunpack.c.l.b16 %v161
    %v378 = vunpack.c.h.b16 %v161
    %v379 = vunpack.c.l.b16 %v162
    %v380 = vunpack.c.h.b16 %v162
    %v381 = vunpack.c.l.b16 %v163
    %v382 = vunpack.c.h.b16 %v163
    %v383 = vunpack.c.l.b16 %v164
    %v384 = vunpack.c.h.b16 %v164
    %v385 = vunpack.c.l.b16 %v165
    %v386 = vunpack.c.h.b16 %v165
    %v387 = vunpack.c.l.b16 %v166
    %v388 = vunpack.c.h.b16 %v166
    %v389 = vunpack.c.l.b16 %v167
    %v390 = vunpack.c.h.b16 %v167
    %v391 = vunpack.c.l.b16 %v168
    %v392 = vunpack.c.h.b16 %v168
    %v393 = vunpack.c.l.b16 %v169
    %v394 = vunpack.c.h.b16 %v169
    %v395 = vunpack.c.l.b16 %v170
    %v396 = vunpack.c.h.b16 %v170
    %v397 = vunpack.c.l.b16 %v171
    %v398 = vunpack.c.h.b16 %v171
    %v399 = vunpack.c.l.b16 %v172
    %v400 = vunpack.c.h.b16 %v172
    %v401 = vunpack.c.l.b16 %v173
    %v402 = vunpack.c.h.b16 %v173
    %v403 = vunpack.c.l.b16 %v174
    %v404 = vunpack.c.h.b16 %v174
    %v405 = vunpack.c.l.b16 %v175
    %v406 = vunpack.c.h.b16 %v175
    %v407 = vunpack.c.l.b16 %v176
    %v408 = vunpack.c.h.b16 %v176
    %v409 = vunpack.c.l.b16 %v177
    %v410 = vunpack.c.h.b16 %v177
    %v411 = vunpack.c.l.b16 %v178
    %v412 = vunpack.c.h.b16 %v178
    %v413 = vunpack.c.l.b16 %v179
    %v414 = vunpack.c.h.b16 %v179
    %v415 = vunpack.c.l.b16 %v180
    %v416 = vunpack.c.h.b16 %v180
    %v417 = vunpack.c.l.b16 %v181
    %v418 = vunpack.c.h.b16 %v181
    %v419 = vunpack.c.l.b16 %v182
    %v420 = vunpack.c.h.b16 %v182
    %v421 = vunpack.c.l.b16 %v183
    %v422 = vunpack.c.h.b16 %v183
    %v423 = vunpack.c.l.b16 %v184
    %v424 = vunpack.c.h.b16 %v184
    %v425 = vunpack.c.l.b16 %v185
    %v426 = vunpack.c.h.b16 %v185
    %v427 = vunpack.c.l.b16 %v186
    %v428 = vunpack.c.h.b16 %v186
    %v429 = vunpack.c.l.b16 %v187
    %v430 = vunpack.c.h.b16 %v187
    %v431 = vunpack.c.l.b16 %v188
    %v432 = vunpack.c.h.b16 %v188
    %v433 = vunpack.c.l.b16 %v189
    %v434 = vunpack.c.h.b16 %v189
    %v435 = vunpack.c.l.b16 %v190
    %v436 = vunpack.c.h.b16 %v190
    %v437 = vunpack.c.l.b16 %v191
    %v438 = vunpack.c.h.b16 %v191
    %v439 = vunpack.c.l.b16 %v192
    %v440 = vunpack.c.h.b16 %v192
    %v441 = vunpack.c.l.b16 %v193
    %v442 = vunpack.c.h.b16 %v193
    %v443 = vunpack.c.l.b16 %v194
    %v444 = vunpack.c.h.b16 %v194
    %v445 = vunpack.c.l.b16 %v195
    %v446 = vunpack.c.h.b16 %v195
    %v447 = vunpack.c.l.b16 %v196
    %v448 = vunpack.c.h.b16 %v196
    %v449 = vunpack.c.l.b16 %v197
    %v450 = vunpack.c.h.b16 %v197
    %v451 = vunpack.c.l.b16 %v198
    %v452 = vunpack.c.h.b16 %v198
    %v453 = vunpack.c.l.b16 %v199
    %v454 = vunpack.c.h.b16 %v199
    %v455 = vunpack.c.l.b16 %v200
    %v456 = vunpack.c.h.b16 %v200
    %v457 = vunpack.c.l.b16 %v201
    %v458 = vunpack.c.h.b16 %v201
    %v459 = vunpack.c.l.b16 %v202
    %v460 = vunpack.c.h.b16 %v202
    %v461 = vunpack.c.l.b16 %v203
    %v462 = vunpack.c.h.b16 %v203
    %v463 = vunpack.c.l.b16 %v204
    %v464 = vunpack.c.h.b16 %v204
    %v465 = vunpack.c.l.b16 %v205
    %v466 = vunpack.c.h.b16 %v205
    %v467 = vunpack.c.l.b16 %v206
    %v468 = vunpack.c.h.b16 %v206
    %v469 = vunpack.c.l.b16 %v207
    %v470 = vunpack.c.h.b16 %v207
    %v471 = vunpack.c.l.b16 %v208
    %v472 = vunpack.c.h.b16 %v208
    %v473 = vunpack.c.l.b16 %v209
    %v474 = vunpack.c.h.b16 %v209
    %v475 = vunpack.c.l.b16 %v210
    %v476 = vunpack.c.h.b16 %v210
    %v477 = vunpack.c.l.b16 %v211
    %v478 = vunpack.c.h.b16 %v211
    %v479 = vunpack.c.l.b16 %v212
    %v480 = vunpack.c.h.b16 %v212
    %v481 = vunpack.c.l.b16 %v213
    %v482 = vunpack.c.h.b16 %v213
    %v483 = vunpack.c.l.b16 %v214
    %v484 = vunpack.c.h.b16 %v214
    %v485 = vunpack.c.l.b16 %v215
    %v486 = vunpack.c.h.b16 %v215
    %v487 = vunpack.c.l.b16 %v216
    %v488 = vunpack.c.h.b16 %v216
    %v489 = vunpack.c.l.b16 %v217
    %v490 = vunpack.c.h.b16 %v217
    %v491 = vunpack.c.l.b16 %v218
    %v492 = vunpack.c.h.b16 %v218
    %v493 = vunpack.c.l.b16 %v219
    %v494 = vunpack.c.h.b16 %v219
    %v495 = vunpack.c.l.b16 %v220
    %v496 = vunpack.c.h.b16 %v220
    %v497 = vunpack.c.l.b16 %v221
    %v498 = vunpack.c.h.b16 %v221
    %v499 = vunpack.c.l.b16 %v222
    %v500 = vunpack.c.h.b16 %v222
    %v501 = vunpack.c.l.b16 %v223
    %v502 = vunpack.c.h.b16 %v223
    %v503 = vunpack.c.l.b16 %v224
    %v504 = vunpack.c.h.b16 %v224
    %v505 = vunpack.c.l.b16 %v225
    %v506 = vunpack.c.h.b16 %v225
    %v507 = vunpack.c.l.b16 %v226
    %v508 = vunpack.c.h.b16 %v226
    %v509 = vunpack.c.l.b16 %v227
    %v510 = vunpack.c.h.b16 %v227
    %v511 = vunpack.c.l.b16 %v228
    %v512 = vunpack.c.h.b16 %v228
    %v513 = vunpack.c.l.b16 %v229
    %v514 = vunpack.c.h.b16 %v229
    %v515 = vunpack.c.l.b16 %v230
    %v516 = vunpack.c.h.b16 %v230
    %v517 = vunpack.c.l.b16 %v231
    %v518 = vunpack.c.h.b16 %v231
    %v519 = vunpack.c.l.b16 %v232
    %v520 = vunpack.c.h.b16 %v232
    %v521 = vunpack.c.l.b16 %v233
    %v522 = vunpack.c.h.b16 %v233
    %v523 = vunpack.c.l.b16 %v234
    %v524 = vunpack.c.h.b16 %v234
    %v525 = vunpack.c.l.b16 %v235
    %v526 = vunpack.c.h.b16 %v235
    %v527 = vunpack.c.l.b16 %v236
    %v528 = vunpack.c.h.b16 %v236
    %v529 = vunpack.c.l.b16 %v237
    %v530 = vunpack.c.h.b16 %v237
    %v531 = vunpack.c.l.b16 %v238
    %v532 = vunpack.c.h.b16 %v238
    %v533 = vunpack.c.l.b16 %v239
    %v534 = vunpack.c.h.b16 %v239
    %v535 = vunpack.c.l.b16 %v240
    %v536 = vunpack.c.h.b16 %v240
    %v537 = vunpack.c.l.b16 %v241
    %v538 = vunpack.c.h.b16 %v241
    %v539 = vunpack.c.l.b16 %v242
    %v540 = vunpack.c.h.b16 %v242
    %v541 = vunpack.c.l.b16 %v243
    %v542 = vunpack.c.h.b16 %v243
    %v543 = vunpack.c.l.b16 %v244
    %v544 = vunpack.c.h.b16 %v244
    %v545 = vunpack.c.l.b16 %v245
    %v546 = vunpack.c.h.b16 %v245
    %v547 = vunpack.c.l.b16 %v246
    %v548 = vunpack.c.h.b16 %v246
    %v549 = vunpack.c.l.b16 %v247
    %v550 = vunpack.c.h.b16 %v247
    %v551 = vunpack.c.l.b16 %v248
    %v552 = vunpack.c.h.b16 %v248
    %v553 = vunpack.c.l.b16 %v249
    %v554 = vunpack.c.h.b16 %v249
    %v555 = vunpack.c.l.b16 %v250
    %v556 = vunpack.c.h.b16 %v250
    %v557 = vpack.c.b16 %v363, %v361
    %v558 = vpack.c.b16 %v364, %v362
    %v559 = vpack.c.b16 %v367, %v365
    %v560 = vpack.c.b16 %v368, %v366
    %v561 = vpack.c.b16 %v371, %v369
    %v562 = vpack.c.b16 %v372, %v370
    %v563 = vpack.c.b16 %v375, %v373
    %v564 = vpack.c.b16 %v376, %v374
    %v565 = vpack.c.b16 %v379, %v377
    %v566 = vpack.c.b16 %v380, %v378
    %v567 = vpack.c.b16 %v383, %v381
    %v568 = vpack.c.b16 %v384, %v382
    %v569 = vpack.c.b16 %v387, %v385
    %v570 = vpack.c.b16 %v388, %v386
    %v571 = vpack.c.b16 %v391, %v389
    %v572 = vpack.c.b16 %v392, %v390
    %v573 = vpack.c.b16 %v395, %v393
    %v574 = vpack.c.b16 %v396, %v394
    %v575 = vpack.c.b16 %v399, %v397
    %v576 = vpack.c.b16 %v400, %v398
    %v577 = vpack.c.b16 %v403, %v401
    %v578 = vpack.c.b16 %v404, %v402
    %v579 = vpack.c.b16 %v407, %v405
    %v580 = vpack.c.b16 %v408, %v406
    %v581 = vpack.c.b16 %v411, %v409
    %v582 = vpack.c.b16 %v412, %v410
    %v583 = vpack.c.b16 %v415, %v413
    %v584 = vpack.c.b16 %v416, %v414
    %v585 = vpack.c.b16 %v419, %v417
    %v586 = vpack.c.b16 %v420, %v418
    %v587 = vpack.c.b16 %v423, %v421
    %v588 = vpack.c.b16 %v424, %v422
    %v589 = vpack.c.b16 %v427, %v425
    %v590 = vpack.c.b16 %v428, %v426
    %v591 = vpack.c.b16 %v431, %v429
    %v592 = vpack.c.b16 %v432, %v430
    %v593 = vpack.c.b16 %v435, %v433
    %v594 = vpack.c.b16 %v436, %v434
    %v595 = vpack.c.b16 %v439, %v437
    %v596 = vpack.c.b16 %v440, %v438
    %v597 = vpack.c.b16 %v443, %v441
    %v598 = vpack.c.b16 %v444, %v442
    %v599 = vpack.c.b16 %v447, %v445
    %v600 = vpack.c.b16 %v448, %v446
    %v601 = vpack.c.b16 %v451, %v449
    %v602 = vpack.c.b16 %v452, %v450
    %v603 = vpack.c.b16 %v455, %v453
    %v604 = vpack.c.b16 %v456, %v454
    %v605 = vpack.c.b16 %v459, %v457
    %v606 = vpack.c.b16 %v460, %v458
    %v607 = vpack.c.b16 %v463, %v461
    %v608 = vpack.c.b16 %v464, %v462
    %v609 = vpack.c.b16 %v467, %v465
    %v610 = vpack.c.b16 %v468, %v466
    %v611 = vpack.c.b16 %v471, %v469
    %v612 = vpack.c.b16 %v472, %v470
    %v613 = vpack.c.b16 %v475, %v473
    %v614 = vpack.c.b16 %v476, %v474
    %v615 = vpack.c.b16 %v479, %v477
    %v616 = vpack.c.b16 %v480, %v478
    %v617 = vpack.c.b16 %v483, %v481
    %v618 = vpack.c.b16 %v484, %v482
    %v619 = vpack.c.b16 %v487, %v485
    %v620 = vpack.c.b16 %v488, %v486
    %v621 = vpack.c.b16 %v491, %v489
    %v622 = vpack.c.b16 %v492, %v490
    %v623 = vpack.c.b16 %v495, %v493
    %v624 = vpack.c.b16 %v496, %v494
    %v625 = vpack.c.b16 %v499, %v497
    %v626 = vpack.c.b16 %v500, %v498
    %v627 = vpack.c.b16 %v503, %v501
    %v628 = vpack.c.b16 %v504, %v502
    %v629 = vpack.c.b16 %v507, %v505
    %v630 = vpack.c.b16 %v508, %v506
    %v631 = vpack.c.b16 %v511, %v509
    %v632 = vpack.c.b16 %v512, %v510
    %v633 = vpack.c.b16 %v515, %v513
    %v634 = vpack.c.b16 %v516, %v514
    %v635 = vpack.c.b16 %v519, %v517
    %v636 = vpack.c.b16 %v520, %v518
    %v637 = vpack.c.b16 %v523, %v521
    %v638 = vpack.c.b16 %v524, %v522
    %v639 = vpack.c.b16 %v527, %v525
    %v640 = vpack.c.b16 %v528, %v526
    %v641 = vpack.c.b16 %v531, %v529
    %v642 = vpack.c.b16 %v532, %v530
    %v643 = vpack.c.b16 %v535, %v533
    %v644 = vpack.c.b16 %v536, %v534
    %v645 = vpack.c.b16 %v539, %v537
    %v646 = vpack.c.b16 %v540, %v538
    %v647 = vpack.c.b16 %v543, %v541
    %v648 = vpack.c.b16 %v544, %v542
    %v649 = vpack.c.b16 %v547, %v545
    %v650 = vpack.c.b16 %v548, %v546
    %v651 = vpack.c.b16 %v551, %v549
    %v652 = vpack.c.b16 %v552, %v550
    %v653 = vpack.c.b16 %v555, %v553
    %v654 = vpack.c.b16 %v556, %v554
    %vm753 = vcmask 130048
    %v755 = vsel %vm753, %v152, 0
    %757 = vmatprep.subr.bf16.mxu0 %v558
    %758 = vmatpush1.bf16.msra.mxu0 %v557
    %759 = vmatprep.subr.bf16.mxu0 %v560
    %760 = vmatpush1.bf16.msra.mxu0 %v559
    %761 = vmatprep.subr.bf16.mxu0 %v562
    %762 = vmatpush1.bf16.msra.mxu0 %v561
    %763 = vmatprep.subr.bf16.mxu0 %v564
    %764 = vmatpush1.bf16.msra.mxu0 %v563
    %765 = vmatprep.subr.bf16.mxu0 %v566
    %766 = vmatpush1.bf16.msra.mxu0 %v565
    %767 = vmatprep.subr.bf16.mxu0 %v568
    %768 = vmatpush1.bf16.msra.mxu0 %v567
    %769 = vmatprep.subr.bf16.mxu0 %v570
    %770 = vmatpush1.bf16.msra.mxu0 %v569
    %771 = vmatprep.subr.bf16.mxu0 %v572
    %772 = vmatpush1.bf16.msra.mxu0 %v571
    %773 = vmatprep.subr.bf16.mxu0 %v574
    %774 = vmatpush1.bf16.msra.mxu0 %v573
    %775 = vmatprep.subr.bf16.mxu0 %v576
    %776 = vmatpush1.bf16.msra.mxu0 %v575
    %777 = vmatprep.subr.bf16.mxu0 %v578
    %778 = vmatpush1.bf16.msra.mxu0 %v577
    %779 = vmatprep.subr.bf16.mxu0 %v580
    %780 = vmatpush1.bf16.msra.mxu0 %v579
    %781 = vmatprep.subr.bf16.mxu0 %v582
    %782 = vmatpush1.bf16.msra.mxu0 %v581
    %783 = vmatprep.subr.bf16.mxu0 %v584
    %784 = vmatpush1.bf16.msra.mxu0 %v583
    %785 = vmatprep.subr.bf16.mxu0 %v586
    %786 = vmatpush1.bf16.msra.mxu0 %v585
    %787 = vmatprep.subr.bf16.mxu0 %v588
    %788 = vmatpush1.bf16.msra.mxu0 %v587
    %789 = vmatprep.mubr.bf16.mxu0 %v147
    %790 = vmatmul.mubr.bf16.gmra.mrb[0].mxu0 %v146
    %v791 = vpop.f32.mrb[0].mxu0
    %v792 = vadd.f32 %v256, %v791
    %v793 = vpop.f32.mrb[0].mxu0
    %v794 = vadd.f32 %v260, %v793
    %v795 = vpop.f32.mrb[0].mxu0
    %v796 = vpop.f32.mrb[0].mxu0
    %797 = vdwg.mxu0
    %798 = vmatprep.subr.bf16.mxu0 %v590
    %799 = vmatpush1.bf16.msra.mxu0 %v589
    %800 = vmatprep.subr.bf16.mxu0 %v592
    %801 = vmatpush1.bf16.msra.mxu0 %v591
    %802 = vmatprep.subr.bf16.mxu0 %v594
    %803 = vmatpush1.bf16.msra.mxu0 %v593
    %804 = vmatprep.subr.bf16.mxu0 %v596
    %805 = vmatpush1.bf16.msra.mxu0 %v595
    %806 = vmatprep.subr.bf16.mxu0 %v598
    %807 = vmatpush1.bf16.msra.mxu0 %v597
    %808 = vmatprep.subr.bf16.mxu0 %v600
    %809 = vmatpush1.bf16.msra.mxu0 %v599
    %810 = vmatprep.subr.bf16.mxu0 %v602
    %811 = vmatpush1.bf16.msra.mxu0 %v601
    %812 = vmatprep.subr.bf16.mxu0 %v604
    %813 = vmatpush1.bf16.msra.mxu0 %v603
    %814 = vmatprep.subr.bf16.mxu0 %v606
    %815 = vmatpush1.bf16.msra.mxu0 %v605
    %816 = vmatprep.subr.bf16.mxu0 %v608
    %817 = vmatpush1.bf16.msra.mxu0 %v607
    %818 = vmatprep.subr.bf16.mxu0 %v610
    %819 = vmatpush1.bf16.msra.mxu0 %v609
    %820 = vmatprep.subr.bf16.mxu0 %v612
    %821 = vmatpush1.bf16.msra.mxu0 %v611
    %822 = vmatprep.subr.bf16.mxu0 %v614
    %823 = vmatpush1.bf16.msra.mxu0 %v613
    %824 = vmatprep.subr.bf16.mxu0 %v616
    %825 = vmatpush1.bf16.msra.mxu0 %v615
    %826 = vmatprep.subr.bf16.mxu0 %v618
    %827 = vmatpush1.bf16.msra.mxu0 %v617
    %828 = vmatprep.subr.bf16.mxu0 %v620
    %829 = vmatpush1.bf16.msra.mxu0 %v619
    %830 = vmatprep.mubr.bf16.mxu0 %v149
    %831 = vmatmul.mubr.bf16.gmra.mrb[0].mxu0 %v148
    %v832 = vpop.f32.mrb[0].mxu0
    %v833 = vadd.f32 %v792, %v832
    %v834 = vpop.f32.mrb[0].mxu0
    %v835 = vadd.f32 %v794, %v834
    %v836 = vpop.f32.mrb[0].mxu0
    %v837 = vpop.f32.mrb[0].mxu0
    %838 = vdwg.mxu0
    %839 = vmatprep.subr.bf16.mxu0 %v622
    %840 = vmatpush1.bf16.msra.mxu0 %v621
    %841 = vmatprep.subr.bf16.mxu0 %v624
    %842 = vmatpush1.bf16.msra.mxu0 %v623
    %843 = vmatprep.subr.bf16.mxu0 %v626
    %844 = vmatpush1.bf16.msra.mxu0 %v625
    %845 = vmatprep.subr.bf16.mxu0 %v628
    %846 = vmatpush1.bf16.msra.mxu0 %v627
    %847 = vmatprep.subr.bf16.mxu0 %v630
    %848 = vmatpush1.bf16.msra.mxu0 %v629
    %849 = vmatprep.subr.bf16.mxu0 %v632
    %850 = vmatpush1.bf16.msra.mxu0 %v631
    %851 = vmatprep.subr.bf16.mxu0 %v634
    %852 = vmatpush1.bf16.msra.mxu0 %v633
    %853 = vmatprep.subr.bf16.mxu0 %v636
    %854 = vmatpush1.bf16.msra.mxu0 %v635
    %855 = vmatprep.subr.bf16.mxu0 %v638
    %856 = vmatpush1.bf16.msra.mxu0 %v637
    %857 = vmatprep.subr.bf16.mxu0 %v640
    %858 = vmatpush1.bf16.msra.mxu0 %v639
    %859 = vmatprep.subr.bf16.mxu0 %v642
    %860 = vmatpush1.bf16.msra.mxu0 %v641
    %861 = vmatprep.subr.bf16.mxu0 %v644
    %862 = vmatpush1.bf16.msra.mxu0 %v643
    %863 = vmatprep.subr.bf16.mxu0 %v646
    %864 = vmatpush1.bf16.msra.mxu0 %v645
    %865 = vmatprep.subr.bf16.mxu0 %v648
    %866 = vmatpush1.bf16.msra.mxu0 %v647
    %867 = vmatprep.subr.bf16.mxu0 %v650
    %868 = vmatpush1.bf16.msra.mxu0 %v649
    %869 = vmatprep.subr.bf16.mxu0 %v652
    %870 = vmatpush1.bf16.msra.mxu0 %v651
    %871 = vmatprep.mubr.bf16.mxu0 %v151
    %872 = vmatmul.mubr.bf16.gmra.mrb[0].mxu0 %v150
    %v873 = vpop.f32.mrb[0].mxu0
    %v874 = vadd.f32 %v833, %v873
    %v875 = vpop.f32.mrb[0].mxu0
    %v876 = vadd.f32 %v835, %v875
    %v877 = vpop.f32.mrb[0].mxu0
    %v878 = vpop.f32.mrb[0].mxu0
    %879 = vdwg.mxu0
    %880 = vmatprep.subr.bf16.mxu0 %v654
    %881 = vmatpush1.bf16.msra.mxu0 %v653
    %882 = vmatprep.subr.bf16.mxu0 0
    %883 = vmatpush1.bf16.msra.mxu0 0
    %884 = vmatprep.subr.bf16.mxu0 0
    %885 = vmatpush1.bf16.msra.mxu0 0
    %886 = vmatprep.subr.bf16.mxu0 0
    %887 = vmatpush1.bf16.msra.mxu0 0
    %888 = vmatprep.subr.bf16.mxu0 0
    %889 = vmatpush1.bf16.msra.mxu0 0
    %890 = vmatprep.subr.bf16.mxu0 0
    %891 = vmatpush1.bf16.msra.mxu0 0
    %892 = vmatprep.subr.bf16.mxu0 0
    %893 = vmatpush1.bf16.msra.mxu0 0
    %894 = vmatprep.subr.bf16.mxu0 0
    %895 = vmatpush1.bf16.msra.mxu0 0
    %896 = vmatprep.subr.bf16.mxu0 0
    %897 = vmatpush1.bf16.msra.mxu0 0
    %898 = vmatprep.subr.bf16.mxu0 0
    %899 = vmatpush1.bf16.msra.mxu0 0
    %900 = vmatprep.subr.bf16.mxu0 0
    %901 = vmatpush1.bf16.msra.mxu0 0
    %902 = vmatprep.subr.bf16.mxu0 0
    %903 = vmatpush1.bf16.msra.mxu0 0
    %904 = vmatprep.subr.bf16.mxu0 0
    %905 = vmatpush1.bf16.msra.mxu0 0
    %906 = vmatprep.subr.bf16.mxu0 0
    %907 = vmatpush1.bf16.msra.mxu0 0
    %908 = vmatprep.subr.bf16.mxu0 0
    %909 = vmatpush1.bf16.msra.mxu0 0
    %910 = vmatprep.subr.bf16.mxu0 0
    %911 = vmatpush1.bf16.msra.mxu0 0
    %912 = vmatprep.mubr.bf16.mxu0 0
    %913 = vmatmul.mubr.bf16.gmra.mrb[0].mxu0 %v755
    %v914 = vpop.f32.mrb[0].mxu0
    %v915 = vadd.f32 %v874, %v914
    %v916 = vpop.f32.mrb[0].mxu0
    %v917 = vadd.f32 %v876, %v916
    %v918 = vpop.f32.mrb[0].mxu0
    %v919 = vpop.f32.mrb[0].mxu0
    %920 = vdwg.mxu0
    %v921 = vmax.f32 %v915, 0.0
    %v922 = vmax.f32 %v917, 0.0
    %v923 = vpack.c.bf16 %v921, %v921
    %v924 = vpack.c.bf16 %v922, %v922
    %v925 = vld [vmem:[#allocation7] sm:$0xff]
    %v926 = vld [vmem:[#allocation7 + $0x8] sm:$0xff]
    %v927 = vld [vmem:[#allocation7 + $0x10] sm:$0xff]
    %v928 = vld [vmem:[#allocation7 + $0x18] sm:$0xff]
    %v929 = vld [vmem:[#allocation7 + $0x20] sm:$0xff]
    %v930 = vld [vmem:[#allocation7 + $0x28] sm:$0xff]
    %v931 = vld [vmem:[#allocation7 + $0x30] sm:$0xff]
    %v932 = vld [vmem:[#allocation7 + $0x38] sm:$0xff]
    %v933 = vld [vmem:[#allocation7 + $0x40] sm:$0xff]
    %v934 = vld [vmem:[#allocation7 + $0x48] sm:$0xff]
    %v935 = vld [vmem:[#allocation7 + $0x50] sm:$0xff]
    %v936 = vld [vmem:[#allocation7 + $0x58] sm:$0xff]
    %v937 = vld [vmem:[#allocation7 + $0x60] sm:$0xff]
    %v938 = vld [vmem:[#allocation7 + $0x68] sm:$0xff]
    %v939 = vld [vmem:[#allocation7 + $0x70] sm:$0xff]
    %v940 = vld [vmem:[#allocation7 + $0x78] sm:$0xff]
    %v941 = vld [vmem:[#allocation7 + $0x80] sm:$0xff]
    %v942 = vld [vmem:[#allocation7 + $0x88] sm:$0xff]
    %v943 = vld [vmem:[#allocation7 + $0x90] sm:$0xff]
    %v944 = vld [vmem:[#allocation7 + $0x98] sm:$0xff]
    %v945 = vld [vmem:[#allocation7 + $0xa0] sm:$0xff]
    %v946 = vld [vmem:[#allocation7 + $0xa8] sm:$0xff]
    %v947 = vld [vmem:[#allocation7 + $0xb0] sm:$0xff]
    %v948 = vld [vmem:[#allocation7 + $0xb8] sm:$0xff]
    %v949 = vld [vmem:[#allocation7 + $0xc0] sm:$0xff]
    %v950 = vld [vmem:[#allocation7 + $0xc8] sm:$0xff]
    %v951 = vld [vmem:[#allocation7 + $0xd0] sm:$0xff]
    %v952 = vld [vmem:[#allocation7 + $0xd8] sm:$0xff]
    %v953 = vld [vmem:[#allocation7 + $0xe0] sm:$0xff]
    %v954 = vld [vmem:[#allocation7 + $0xe8] sm:$0xff]
    %v955 = vld [vmem:[#allocation7 + $0xf0] sm:$0xff]
    %v956 = vld [vmem:[#allocation7 + $0xf8] sm:$0xff]
    %v957 = vld [vmem:[%s4] sm:$0x3]
    %v959 = vlaneseq
    %v960 = vshrl.u32 %v959, 7
    %v961 = vsub.s32 0, %v960
    %v962 = vrot.slane %v957, %v961
    %v963 = vlaneseq
    %v964 = vshrl.u32 %v963, 7
    %v965 = vsub.s32 1, %v964
    %v966 = vrot.slane %v957, %v965
    %v1001 = vunpack.c.l.b16 %v925
    %v1002 = vunpack.c.h.b16 %v925
    %v1003 = vunpack.c.l.b16 %v926
    %v1004 = vunpack.c.h.b16 %v926
    %v1005 = vunpack.c.l.b16 %v927
    %v1006 = vunpack.c.h.b16 %v927
    %v1007 = vunpack.c.l.b16 %v928
    %v1008 = vunpack.c.h.b16 %v928
    %v1009 = vunpack.c.l.b16 %v929
    %v1010 = vunpack.c.h.b16 %v929
    %v1011 = vunpack.c.l.b16 %v930
    %v1012 = vunpack.c.h.b16 %v930
    %v1013 = vunpack.c.l.b16 %v931
    %v1014 = vunpack.c.h.b16 %v931
    %v1015 = vunpack.c.l.b16 %v932
    %v1016 = vunpack.c.h.b16 %v932
    %v1017 = vunpack.c.l.b16 %v933
    %v1018 = vunpack.c.h.b16 %v933
    %v1019 = vunpack.c.l.b16 %v934
    %v1020 = vunpack.c.h.b16 %v934
    %v1021 = vunpack.c.l.b16 %v935
    %v1022 = vunpack.c.h.b16 %v935
    %v1023 = vunpack.c.l.b16 %v936
    %v1024 = vunpack.c.h.b16 %v936
    %v1025 = vunpack.c.l.b16 %v937
    %v1026 = vunpack.c.h.b16 %v937
    %v1027 = vunpack.c.l.b16 %v938
    %v1028 = vunpack.c.h.b16 %v938
    %v1029 = vunpack.c.l.b16 %v939
    %v1030 = vunpack.c.h.b16 %v939
    %v1031 = vunpack.c.l.b16 %v940
    %v1032 = vunpack.c.h.b16 %v940
    %v1033 = vunpack.c.l.b16 %v941
    %v1034 = vunpack.c.h.b16 %v941
    %v1035 = vunpack.c.l.b16 %v942
    %v1036 = vunpack.c.h.b16 %v942
    %v1037 = vunpack.c.l.b16 %v943
    %v1038 = vunpack.c.h.b16 %v943
    %v1039 = vunpack.c.l.b16 %v944
    %v1040 = vunpack.c.h.b16 %v944
    %v1041 = vunpack.c.l.b16 %v945
    %v1042 = vunpack.c.h.b16 %v945
    %v1043 = vunpack.c.l.b16 %v946
    %v1044 = vunpack.c.h.b16 %v946
    %v1045 = vunpack.c.l.b16 %v947
    %v1046 = vunpack.c.h.b16 %v947
    %v1047 = vunpack.c.l.b16 %v948
    %v1048 = vunpack.c.h.b16 %v948
    %v1049 = vunpack.c.l.b16 %v949
    %v1050 = vunpack.c.h.b16 %v949
    %v1051 = vunpack.c.l.b16 %v950
    %v1052 = vunpack.c.h.b16 %v950
    %v1053 = vunpack.c.l.b16 %v951
    %v1054 = vunpack.c.h.b16 %v951
    %v1055 = vunpack.c.l.b16 %v952
    %v1056 = vunpack.c.h.b16 %v952
    %v1057 = vunpack.c.l.b16 %v953
    %v1058 = vunpack.c.h.b16 %v953
    %v1059 = vunpack.c.l.b16 %v954
    %v1060 = vunpack.c.h.b16 %v954
    %v1061 = vunpack.c.l.b16 %v955
    %v1062 = vunpack.c.h.b16 %v955
    %v1063 = vunpack.c.l.b16 %v956
    %v1064 = vunpack.c.h.b16 %v956
    %v1065 = vpack.c.b16 %v1003, %v1001
    %v1066 = vpack.c.b16 %v1004, %v1002
    %v1067 = vpack.c.b16 %v1007, %v1005
    %v1068 = vpack.c.b16 %v1008, %v1006
    %v1069 = vpack.c.b16 %v1011, %v1009
    %v1070 = vpack.c.b16 %v1012, %v1010
    %v1071 = vpack.c.b16 %v1015, %v1013
    %v1072 = vpack.c.b16 %v1016, %v1014
    %v1073 = vpack.c.b16 %v1019, %v1017
    %v1074 = vpack.c.b16 %v1020, %v1018
    %v1075 = vpack.c.b16 %v1023, %v1021
    %v1076 = vpack.c.b16 %v1024, %v1022
    %v1077 = vpack.c.b16 %v1027, %v1025
    %v1078 = vpack.c.b16 %v1028, %v1026
    %v1079 = vpack.c.b16 %v1031, %v1029
    %v1080 = vpack.c.b16 %v1032, %v1030
    %v1081 = vpack.c.b16 %v1035, %v1033
    %v1082 = vpack.c.b16 %v1036, %v1034
    %v1083 = vpack.c.b16 %v1039, %v1037
    %v1084 = vpack.c.b16 %v1040, %v1038
    %v1085 = vpack.c.b16 %v1043, %v1041
    %v1086 = vpack.c.b16 %v1044, %v1042
    %v1087 = vpack.c.b16 %v1047, %v1045
    %v1088 = vpack.c.b16 %v1048, %v1046
    %v1089 = vpack.c.b16 %v1051, %v1049
    %v1090 = vpack.c.b16 %v1052, %v1050
    %v1091 = vpack.c.b16 %v1055, %v1053
    %v1092 = vpack.c.b16 %v1056, %v1054
    %v1093 = vpack.c.b16 %v1059, %v1057
    %v1094 = vpack.c.b16 %v1060, %v1058
    %v1095 = vpack.c.b16 %v1063, %v1061
    %v1096 = vpack.c.b16 %v1064, %v1062
    %1129 = vmatprep.subr.bf16.mxu0 %v1066
    %1130 = vmatpush1.bf16.msra.mxu0 %v1065
    %1131 = vmatprep.subr.bf16.mxu0 %v1068
    %1132 = vmatpush1.bf16.msra.mxu0 %v1067
    %1133 = vmatprep.subr.bf16.mxu0 %v1070
    %1134 = vmatpush1.bf16.msra.mxu0 %v1069
    %1135 = vmatprep.subr.bf16.mxu0 %v1072
    %1136 = vmatpush1.bf16.msra.mxu0 %v1071
    %1137 = vmatprep.subr.bf16.mxu0 %v1074
    %1138 = vmatpush1.bf16.msra.mxu0 %v1073
    %1139 = vmatprep.subr.bf16.mxu0 %v1076
    %1140 = vmatpush1.bf16.msra.mxu0 %v1075
    %1141 = vmatprep.subr.bf16.mxu0 %v1078
    %1142 = vmatpush1.bf16.msra.mxu0 %v1077
    %1143 = vmatprep.subr.bf16.mxu0 %v1080
    %1144 = vmatpush1.bf16.msra.mxu0 %v1079
    %1145 = vmatprep.subr.bf16.mxu0 %v1082
    %1146 = vmatpush1.bf16.msra.mxu0 %v1081
    %1147 = vmatprep.subr.bf16.mxu0 %v1084
    %1148 = vmatpush1.bf16.msra.mxu0 %v1083
    %1149 = vmatprep.subr.bf16.mxu0 %v1086
    %1150 = vmatpush1.bf16.msra.mxu0 %v1085
    %1151 = vmatprep.subr.bf16.mxu0 %v1088
    %1152 = vmatpush1.bf16.msra.mxu0 %v1087
    %1153 = vmatprep.subr.bf16.mxu0 %v1090
    %1154 = vmatpush1.bf16.msra.mxu0 %v1089
    %1155 = vmatprep.subr.bf16.mxu0 %v1092
    %1156 = vmatpush1.bf16.msra.mxu0 %v1091
    %1157 = vmatprep.subr.bf16.mxu0 %v1094
    %1158 = vmatpush1.bf16.msra.mxu0 %v1093
    %1159 = vmatprep.subr.bf16.mxu0 %v1096
    %1160 = vmatpush1.bf16.msra.mxu0 %v1095
    %1161 = vmatprep.mubr.bf16.mxu0 %v924
    %1162 = vmatmul.mubr.bf16.gmra.mrb[0].mxu0 %v923
    %v1163 = vpop.f32.mrb[0].mxu0
    %v1164 = vadd.f32 %v962, %v1163
    %v1165 = vpop.f32.mrb[0].mxu0
    %v1166 = vadd.f32 %v966, %v1165
    %v1167 = vpop.f32.mrb[0].mxu0
    %v1168 = vpop.f32.mrb[0].mxu0
    %1169 = vdwg.mxu0
    %v1170 = vmax.f32 %v1164, 0.0
    %v1171 = vmax.f32 %v1166, 0.0
    %v1172 = vpack.c.bf16 %v1170, %v1170
    %v1173 = vpack.c.bf16 %v1171, %v1171
    %v1174 = vld [vmem:[#allocation8] sm:$0xff]
    %v1175 = vld [vmem:[#allocation8 + $0x8] sm:$0xff]
    %v1176 = vld [vmem:[#allocation8 + $0x10] sm:$0xff]
    %v1177 = vld [vmem:[#allocation8 + $0x18] sm:$0xff]
    %v1178 = vld [vmem:[#allocation8 + $0x20] sm:$0xff]
    %v1179 = vld [vmem:[#allocation8 + $0x28] sm:$0xff]
    %v1180 = vld [vmem:[#allocation8 + $0x30] sm:$0xff]
    %v1181 = vld [vmem:[#allocation8 + $0x38] sm:$0xff]
    %v1182 = vld [vmem:[#allocation8 + $0x40] sm:$0xff]
    %v1183 = vld [vmem:[#allocation8 + $0x48] sm:$0xff]
    %v1184 = vld [vmem:[#allocation8 + $0x50] sm:$0xff]
    %v1185 = vld [vmem:[#allocation8 + $0x58] sm:$0xff]
    %v1186 = vld [vmem:[#allocation8 + $0x60] sm:$0xff]
    %v1187 = vld [vmem:[#allocation8 + $0x68] sm:$0xff]
    %v1188 = vld [vmem:[#allocation8 + $0x70] sm:$0xff]
    %v1189 = vld [vmem:[#allocation8 + $0x78] sm:$0xff]
    %v1190 = vld [vmem:[#allocation8 + $0x80] sm:$0xff]
    %v1191 = vld [vmem:[#allocation8 + $0x88] sm:$0xff]
    %v1192 = vld [vmem:[#allocation8 + $0x90] sm:$0xff]
    %v1193 = vld [vmem:[#allocation8 + $0x98] sm:$0xff]
    %v1194 = vld [vmem:[#allocation8 + $0xa0] sm:$0xff]
    %v1195 = vld [vmem:[#allocation8 + $0xa8] sm:$0xff]
    %v1196 = vld [vmem:[#allocation8 + $0xb0] sm:$0xff]
    %v1197 = vld [vmem:[#allocation8 + $0xb8] sm:$0xff]
    %v1198 = vld [vmem:[#allocation8 + $0xc0] sm:$0xff]
    %v1199 = vld [vmem:[#allocation8 + $0xc8] sm:$0xff]
    %v1200 = vld [vmem:[#allocation8 + $0xd0] sm:$0xff]
    %v1201 = vld [vmem:[#allocation8 + $0xd8] sm:$0xff]
    %v1202 = vld [vmem:[#allocation8 + $0xe0] sm:$0xff]
    %v1203 = vld [vmem:[#allocation8 + $0xe8] sm:$0xff]
    %v1204 = vld [vmem:[#allocation8 + $0xf0] sm:$0xff]
    %v1205 = vld [vmem:[#allocation8 + $0xf8] sm:$0xff]
    %v1206 = vld [vmem:[%s6] sm:$0x3]
    %v1208 = vlaneseq
    %v1209 = vshrl.u32 %v1208, 7
    %v1210 = vsub.s32 0, %v1209
    %v1211 = vrot.slane %v1206, %v1210
    %v1212 = vlaneseq
    %v1213 = vshrl.u32 %v1212, 7
    %v1214 = vsub.s32 1, %v1213
    %v1215 = vrot.slane %v1206, %v1214
    %v1250 = vunpack.c.l.b16 %v1174
    %v1251 = vunpack.c.h.b16 %v1174
    %v1252 = vunpack.c.l.b16 %v1175
    %v1253 = vunpack.c.h.b16 %v1175
    %v1254 = vunpack.c.l.b16 %v1176
    %v1255 = vunpack.c.h.b16 %v1176
    %v1256 = vunpack.c.l.b16 %v1177
    %v1257 = vunpack.c.h.b16 %v1177
    %v1258 = vunpack.c.l.b16 %v1178
    %v1259 = vunpack.c.h.b16 %v1178
    %v1260 = vunpack.c.l.b16 %v1179
    %v1261 = vunpack.c.h.b16 %v1179
    %v1262 = vunpack.c.l.b16 %v1180
    %v1263 = vunpack.c.h.b16 %v1180
    %v1264 = vunpack.c.l.b16 %v1181
    %v1265 = vunpack.c.h.b16 %v1181
    %v1266 = vunpack.c.l.b16 %v1182
    %v1267 = vunpack.c.h.b16 %v1182
    %v1268 = vunpack.c.l.b16 %v1183
    %v1269 = vunpack.c.h.b16 %v1183
    %v1270 = vunpack.c.l.b16 %v1184
    %v1271 = vunpack.c.h.b16 %v1184
    %v1272 = vunpack.c.l.b16 %v1185
    %v1273 = vunpack.c.h.b16 %v1185
    %v1274 = vunpack.c.l.b16 %v1186
    %v1275 = vunpack.c.h.b16 %v1186
    %v1276 = vunpack.c.l.b16 %v1187
    %v1277 = vunpack.c.h.b16 %v1187
    %v1278 = vunpack.c.l.b16 %v1188
    %v1279 = vunpack.c.h.b16 %v1188
    %v1280 = vunpack.c.l.b16 %v1189
    %v1281 = vunpack.c.h.b16 %v1189
    %v1282 = vunpack.c.l.b16 %v1190
    %v1283 = vunpack.c.h.b16 %v1190
    %v1284 = vunpack.c.l.b16 %v1191
    %v1285 = vunpack.c.h.b16 %v1191
    %v1286 = vunpack.c.l.b16 %v1192
    %v1287 = vunpack.c.h.b16 %v1192
    %v1288 = vunpack.c.l.b16 %v1193
    %v1289 = vunpack.c.h.b16 %v1193
    %v1290 = vunpack.c.l.b16 %v1194
    %v1291 = vunpack.c.h.b16 %v1194
    %v1292 = vunpack.c.l.b16 %v1195
    %v1293 = vunpack.c.h.b16 %v1195
    %v1294 = vunpack.c.l.b16 %v1196
    %v1295 = vunpack.c.h.b16 %v1196
    %v1296 = vunpack.c.l.b16 %v1197
    %v1297 = vunpack.c.h.b16 %v1197
    %v1298 = vunpack.c.l.b16 %v1198
    %v1299 = vunpack.c.h.b16 %v1198
    %v1300 = vunpack.c.l.b16 %v1199
    %v1301 = vunpack.c.h.b16 %v1199
    %v1302 = vunpack.c.l.b16 %v1200
    %v1303 = vunpack.c.h.b16 %v1200
    %v1304 = vunpack.c.l.b16 %v1201
    %v1305 = vunpack.c.h.b16 %v1201
    %v1306 = vunpack.c.l.b16 %v1202
    %v1307 = vunpack.c.h.b16 %v1202
    %v1308 = vunpack.c.l.b16 %v1203
    %v1309 = vunpack.c.h.b16 %v1203
    %v1310 = vunpack.c.l.b16 %v1204
    %v1311 = vunpack.c.h.b16 %v1204
    %v1312 = vunpack.c.l.b16 %v1205
    %v1313 = vunpack.c.h.b16 %v1205
    %v1314 = vpack.c.b16 %v1252, %v1250
    %v1315 = vpack.c.b16 %v1253, %v1251
    %v1316 = vpack.c.b16 %v1256, %v1254
    %v1317 = vpack.c.b16 %v1257, %v1255
    %v1318 = vpack.c.b16 %v1260, %v1258
    %v1319 = vpack.c.b16 %v1261, %v1259
    %v1320 = vpack.c.b16 %v1264, %v1262
    %v1321 = vpack.c.b16 %v1265, %v1263
    %v1322 = vpack.c.b16 %v1268, %v1266
    %v1323 = vpack.c.b16 %v1269, %v1267
    %v1324 = vpack.c.b16 %v1272, %v1270
    %v1325 = vpack.c.b16 %v1273, %v1271
    %v1326 = vpack.c.b16 %v1276, %v1274
    %v1327 = vpack.c.b16 %v1277, %v1275
    %v1328 = vpack.c.b16 %v1280, %v1278
    %v1329 = vpack.c.b16 %v1281, %v1279
    %v1330 = vpack.c.b16 %v1284, %v1282
    %v1331 = vpack.c.b16 %v1285, %v1283
    %v1332 = vpack.c.b16 %v1288, %v1286
    %v1333 = vpack.c.b16 %v1289, %v1287
    %v1334 = vpack.c.b16 %v1292, %v1290
    %v1335 = vpack.c.b16 %v1293, %v1291
    %v1336 = vpack.c.b16 %v1296, %v1294
    %v1337 = vpack.c.b16 %v1297, %v1295
    %v1338 = vpack.c.b16 %v1300, %v1298
    %v1339 = vpack.c.b16 %v1301, %v1299
    %v1340 = vpack.c.b16 %v1304, %v1302
    %v1341 = vpack.c.b16 %v1305, %v1303
    %v1342 = vpack.c.b16 %v1308, %v1306
    %v1343 = vpack.c.b16 %v1309, %v1307
    %v1344 = vpack.c.b16 %v1312, %v1310
    %v1345 = vpack.c.b16 %v1313, %v1311
    %1378 = vmatprep.subr.bf16.mxu0 %v1315
    %1379 = vmatpush1.bf16.msra.mxu0 %v1314
    %1380 = vmatprep.subr.bf16.mxu0 %v1317
    %1381 = vmatpush1.bf16.msra.mxu0 %v1316
    %1382 = vmatprep.subr.bf16.mxu0 %v1319
    %1383 = vmatpush1.bf16.msra.mxu0 %v1318
    %1384 = vmatprep.subr.bf16.mxu0 %v1321
    %1385 = vmatpush1.bf16.msra.mxu0 %v1320
    %1386 = vmatprep.subr.bf16.mxu0 %v1323
    %1387 = vmatpush1.bf16.msra.mxu0 %v1322
    %1388 = vmatprep.subr.bf16.mxu0 %v1325
    %1389 = vmatpush1.bf16.msra.mxu0 %v1324
    %1390 = vmatprep.subr.bf16.mxu0 %v1327
    %1391 = vmatpush1.bf16.msra.mxu0 %v1326
    %1392 = vmatprep.subr.bf16.mxu0 %v1329
    %1393 = vmatpush1.bf16.msra.mxu0 %v1328
    %1394 = vmatprep.subr.bf16.mxu0 %v1331
    %1395 = vmatpush1.bf16.msra.mxu0 %v1330
    %1396 = vmatprep.subr.bf16.mxu0 %v1333
    %1397 = vmatpush1.bf16.msra.mxu0 %v1332
    %1398 = vmatprep.subr.bf16.mxu0 %v1335
    %1399 = vmatpush1.bf16.msra.mxu0 %v1334
    %1400 = vmatprep.subr.bf16.mxu0 %v1337
    %1401 = vmatpush1.bf16.msra.mxu0 %v1336
    %1402 = vmatprep.subr.bf16.mxu0 %v1339
    %1403 = vmatpush1.bf16.msra.mxu0 %v1338
    %1404 = vmatprep.subr.bf16.mxu0 %v1341
    %1405 = vmatpush1.bf16.msra.mxu0 %v1340
    %1406 = vmatprep.subr.bf16.mxu0 %v1343
    %1407 = vmatpush1.bf16.msra.mxu0 %v1342
    %1408 = vmatprep.subr.bf16.mxu0 %v1345
    %1409 = vmatpush1.bf16.msra.mxu0 %v1344
    %1410 = vmatprep.mubr.bf16.mxu0 %v1173
    %1411 = vmatmul.mubr.bf16.gmra.mrb[0].mxu0 %v1172
    %v1412 = vpop.f32.mrb[0].mxu0
    %v1413 = vadd.f32 %v1211, %v1412
    %v1414 = vpop.f32.mrb[0].mxu0
    %v1415 = vadd.f32 %v1215, %v1414
    %v1416 = vpop.f32.mrb[0].mxu0
    %v1417 = vpop.f32.mrb[0].mxu0
    %1418 = vdwg.mxu0
    %v1419 = vmax.f32 %v1413, 0.0
    %v1420 = vmax.f32 %v1415, 0.0
    %v1421 = vpack.c.bf16 %v1419, %v1419
    %v1422 = vpack.c.bf16 %v1420, %v1420
    %v1423 = vld [vmem:[#allocation10] sm:$0xf]
    %v1424 = vld [vmem:[#allocation10 + $0x4] sm:$0xf]
    %v1425 = vld [vmem:[#allocation10 + $0x8] sm:$0xf]
    %v1426 = vld [vmem:[#allocation10 + $0xc] sm:$0xf]
    %v1427 = vld [vmem:[#allocation10 + $0x10] sm:$0xf]
    %v1428 = vld [vmem:[#allocation10 + $0x14] sm:$0xf]
    %v1429 = vld [vmem:[#allocation10 + $0x18] sm:$0xf]
    %v1430 = vld [vmem:[#allocation10 + $0x1c] sm:$0xf]
    %v1431 = vld [vmem:[#allocation10 + $0x20] sm:$0xf]
    %v1432 = vld [vmem:[#allocation10 + $0x24] sm:$0xf]
    %v1433 = vld [vmem:[#allocation10 + $0x28] sm:$0xf]
    %v1434 = vld [vmem:[#allocation10 + $0x2c] sm:$0xf]
    %v1435 = vld [vmem:[#allocation10 + $0x30] sm:$0xf]
    %v1436 = vld [vmem:[#allocation10 + $0x34] sm:$0xf]
    %v1437 = vld [vmem:[#allocation10 + $0x38] sm:$0xf]
    %v1438 = vld [vmem:[#allocation10 + $0x3c] sm:$0xf]
    %v1439 = vld [vmem:[#allocation10 + $0x40] sm:$0xf]
    %v1440 = vld [vmem:[#allocation10 + $0x44] sm:$0xf]
    %v1441 = vld [vmem:[#allocation10 + $0x48] sm:$0xf]
    %v1442 = vld [vmem:[#allocation10 + $0x4c] sm:$0xf]
    %v1443 = vld [vmem:[#allocation10 + $0x50] sm:$0xf]
    %v1444 = vld [vmem:[#allocation10 + $0x54] sm:$0xf]
    %v1445 = vld [vmem:[#allocation10 + $0x58] sm:$0xf]
    %v1446 = vld [vmem:[#allocation10 + $0x5c] sm:$0xf]
    %v1447 = vld [vmem:[#allocation10 + $0x60] sm:$0xf]
    %v1448 = vld [vmem:[#allocation10 + $0x64] sm:$0xf]
    %v1449 = vld [vmem:[#allocation10 + $0x68] sm:$0xf]
    %v1450 = vld [vmem:[#allocation10 + $0x6c] sm:$0xf]
    %v1451 = vld [vmem:[#allocation10 + $0x70] sm:$0xf]
    %v1452 = vld [vmem:[#allocation10 + $0x74] sm:$0xf]
    %v1453 = vld [vmem:[#allocation10 + $0x78] sm:$0xf]
    %v1454 = vld [vmem:[#allocation10 + $0x7c] sm:$0xf]
    %v1455 = vld [vmem:[%s8] sm:$0x1]
    %v1457 = vlaneseq
    %v1458 = vshrl.u32 %v1457, 7
    %v1459 = vsub.s32 0, %v1458
    %v1460 = vrot.slane %v1455, %v1459
    %v1494 = vunpack.c.l.b16 %v1423
    %v1495 = vunpack.c.l.b16 %v1424
    %v1496 = vunpack.c.l.b16 %v1425
    %v1497 = vunpack.c.l.b16 %v1426
    %v1498 = vunpack.c.l.b16 %v1427
    %v1499 = vunpack.c.l.b16 %v1428
    %v1500 = vunpack.c.l.b16 %v1429
    %v1501 = vunpack.c.l.b16 %v1430
    %v1502 = vunpack.c.l.b16 %v1431
    %v1503 = vunpack.c.l.b16 %v1432
    %v1504 = vunpack.c.l.b16 %v1433
    %v1505 = vunpack.c.l.b16 %v1434
    %v1506 = vunpack.c.l.b16 %v1435
    %v1507 = vunpack.c.l.b16 %v1436
    %v1508 = vunpack.c.l.b16 %v1437
    %v1509 = vunpack.c.l.b16 %v1438
    %v1510 = vunpack.c.l.b16 %v1439
    %v1511 = vunpack.c.l.b16 %v1440
    %v1512 = vunpack.c.l.b16 %v1441
    %v1513 = vunpack.c.l.b16 %v1442
    %v1514 = vunpack.c.l.b16 %v1443
    %v1515 = vunpack.c.l.b16 %v1444
    %v1516 = vunpack.c.l.b16 %v1445
    %v1517 = vunpack.c.l.b16 %v1446
    %v1518 = vunpack.c.l.b16 %v1447
    %v1519 = vunpack.c.l.b16 %v1448
    %v1520 = vunpack.c.l.b16 %v1449
    %v1521 = vunpack.c.l.b16 %v1450
    %v1522 = vunpack.c.l.b16 %v1451
    %v1523 = vunpack.c.l.b16 %v1452
    %v1524 = vunpack.c.l.b16 %v1453
    %v1525 = vunpack.c.l.b16 %v1454
    %v1526 = vpack.c.b16 %v1495, %v1494
    %v1527 = vpack.c.b16 %v1497, %v1496
    %v1528 = vpack.c.b16 %v1499, %v1498
    %v1529 = vpack.c.b16 %v1501, %v1500
    %v1530 = vpack.c.b16 %v1503, %v1502
    %v1531 = vpack.c.b16 %v1505, %v1504
    %v1532 = vpack.c.b16 %v1507, %v1506
    %v1533 = vpack.c.b16 %v1509, %v1508
    %v1534 = vpack.c.b16 %v1511, %v1510
    %v1535 = vpack.c.b16 %v1513, %v1512
    %v1536 = vpack.c.b16 %v1515, %v1514
    %v1537 = vpack.c.b16 %v1517, %v1516
    %v1538 = vpack.c.b16 %v1519, %v1518
    %v1539 = vpack.c.b16 %v1521, %v1520
    %v1540 = vpack.c.b16 %v1523, %v1522
    %v1541 = vpack.c.b16 %v1525, %v1524
    %1558 = vmatprep.subr.bf16.mxu0 0
    %1559 = vmatpush1.bf16.msra.mxu0 %v1526
    %1560 = vmatprep.subr.bf16.mxu0 0
    %1561 = vmatpush1.bf16.msra.mxu0 %v1527
    %1562 = vmatprep.subr.bf16.mxu0 0
    %1563 = vmatpush1.bf16.msra.mxu0 %v1528
    %1564 = vmatprep.subr.bf16.mxu0 0
    %1565 = vmatpush1.bf16.msra.mxu0 %v1529
    %1566 = vmatprep.subr.bf16.mxu0 0
    %1567 = vmatpush1.bf16.msra.mxu0 %v1530
    %1568 = vmatprep.subr.bf16.mxu0 0
    %1569 = vmatpush1.bf16.msra.mxu0 %v1531
    %1570 = vmatprep.subr.bf16.mxu0 0
    %1571 = vmatpush1.bf16.msra.mxu0 %v1532
    %1572 = vmatprep.subr.bf16.mxu0 0
    %1573 = vmatpush1.bf16.msra.mxu0 %v1533
    %1574 = vmatprep.subr.bf16.mxu0 0
    %1575 = vmatpush1.bf16.msra.mxu0 %v1534
    %1576 = vmatprep.subr.bf16.mxu0 0
    %1577 = vmatpush1.bf16.msra.mxu0 %v1535
    %1578 = vmatprep.subr.bf16.mxu0 0
    %1579 = vmatpush1.bf16.msra.mxu0 %v1536
    %1580 = vmatprep.subr.bf16.mxu0 0
    %1581 = vmatpush1.bf16.msra.mxu0 %v1537
    %1582 = vmatprep.subr.bf16.mxu0 0
    %1583 = vmatpush1.bf16.msra.mxu0 %v1538
    %1584 = vmatprep.subr.bf16.mxu0 0
    %1585 = vmatpush1.bf16.msra.mxu0 %v1539
    %1586 = vmatprep.subr.bf16.mxu0 0
    %1587 = vmatpush1.bf16.msra.mxu0 %v1540
    %1588 = vmatprep.subr.bf16.mxu0 0
    %1589 = vmatpush1.bf16.msra.mxu0 %v1541
    %1590 = vmatprep.mubr.bf16.mxu0 %v1422
    %1591 = vmatmul.mubr.bf16.gmra.mrb[0].mxu0 %v1421
    %v1592 = vpop.f32.mrb[0].mxu0
    %v1593 = vadd.f32 %v1460, %v1592
    %v1594 = vpop.f32.mrb[0].mxu0
    %v1595 = vpop.f32.mrb[0].mxu0
    %v1596 = vpop.f32.mrb[0].mxu0
    %1597 = vdwg.mxu0
    %v1598 = vmax.f32 %v1593, 0.0
    %v1599 = vpack.c.bf16 %v1598, %v1598
    %v1600 = vld [vmem:[#allocation11] sm:$0xf]
    %v1601 = vld [vmem:[#allocation11 + $0x4] sm:$0xf]
    %v1602 = vld [vmem:[#allocation11 + $0x8] sm:$0xf]
    %v1603 = vld [vmem:[#allocation11 + $0xc] sm:$0xf]
    %v1604 = vld [vmem:[#allocation11 + $0x10] sm:$0xf]
    %v1605 = vld [vmem:[#allocation11 + $0x14] sm:$0xf]
    %v1606 = vld [vmem:[#allocation11 + $0x18] sm:$0xf]
    %v1607 = vld [vmem:[#allocation11 + $0x1c] sm:$0xf]
    %v1608 = vld [vmem:[#allocation11 + $0x20] sm:$0xf]
    %v1609 = vld [vmem:[#allocation11 + $0x24] sm:$0xf]
    %v1610 = vld [vmem:[#allocation11 + $0x28] sm:$0xf]
    %v1611 = vld [vmem:[#allocation11 + $0x2c] sm:$0xf]
    %v1612 = vld [vmem:[#allocation11 + $0x30] sm:$0xf]
    %v1613 = vld [vmem:[#allocation11 + $0x34] sm:$0xf]
    %v1614 = vld [vmem:[#allocation11 + $0x38] sm:$0xf]
    %v1615 = vld [vmem:[#allocation11 + $0x3c] sm:$0xf]
    %v1616 = vld [vmem:[%s10] sm:$0x1]
    %v1618 = vlaneseq
    %v1619 = vshrl.u32 %v1618, 7
    %v1620 = vsub.s32 0, %v1619
    %v1621 = vrot.slane %v1616, %v1620
    %v1639 = vunpack.c.l.b16 %v1600
    %v1640 = vunpack.c.l.b16 %v1601
    %v1641 = vunpack.c.l.b16 %v1602
    %v1642 = vunpack.c.l.b16 %v1603
    %v1643 = vunpack.c.l.b16 %v1604
    %v1644 = vunpack.c.l.b16 %v1605
    %v1645 = vunpack.c.l.b16 %v1606
    %v1646 = vunpack.c.l.b16 %v1607
    %v1647 = vunpack.c.l.b16 %v1608
    %v1648 = vunpack.c.l.b16 %v1609
    %v1649 = vunpack.c.l.b16 %v1610
    %v1650 = vunpack.c.l.b16 %v1611
    %v1651 = vunpack.c.l.b16 %v1612
    %v1652 = vunpack.c.l.b16 %v1613
    %v1653 = vunpack.c.l.b16 %v1614
    %v1654 = vunpack.c.l.b16 %v1615
    %v1655 = vpack.c.b16 %v1640, %v1639
    %v1656 = vpack.c.b16 %v1642, %v1641
    %v1657 = vpack.c.b16 %v1644, %v1643
    %v1658 = vpack.c.b16 %v1646, %v1645
    %v1659 = vpack.c.b16 %v1648, %v1647
    %v1660 = vpack.c.b16 %v1650, %v1649
    %v1661 = vpack.c.b16 %v1652, %v1651
    %v1662 = vpack.c.b16 %v1654, %v1653
    %1671 = vmatprep.subr.bf16.mxu0 0
    %1672 = vmatpush1.bf16.msra.mxu0 %v1655
    %1673 = vmatprep.subr.bf16.mxu0 0
    %1674 = vmatpush1.bf16.msra.mxu0 %v1656
    %1675 = vmatprep.subr.bf16.mxu0 0
    %1676 = vmatpush1.bf16.msra.mxu0 %v1657
    %1677 = vmatprep.subr.bf16.mxu0 0
    %1678 = vmatpush1.bf16.msra.mxu0 %v1658
    %1679 = vmatprep.subr.bf16.mxu0 0
    %1680 = vmatpush1.bf16.msra.mxu0 %v1659
    %1681 = vmatprep.subr.bf16.mxu0 0
    %1682 = vmatpush1.bf16.msra.mxu0 %v1660
    %1683 = vmatprep.subr.bf16.mxu0 0
    %1684 = vmatpush1.bf16.msra.mxu0 %v1661
    %1685 = vmatprep.subr.bf16.mxu0 0
    %1686 = vmatpush1.bf16.msra.mxu0 %v1662
    %1687 = vmatprep.subr.bf16.mxu0 0
    %1688 = vmatpush1.bf16.msra.mxu0 0
    %1689 = vmatprep.subr.bf16.mxu0 0
    %1690 = vmatpush1.bf16.msra.mxu0 0
    %1691 = vmatprep.subr.bf16.mxu0 0
    %1692 = vmatpush1.bf16.msra.mxu0 0
    %1693 = vmatprep.subr.bf16.mxu0 0
    %1694 = vmatpush1.bf16.msra.mxu0 0
    %1695 = vmatprep.subr.bf16.mxu0 0
    %1696 = vmatpush1.bf16.msra.mxu0 0
    %1697 = vmatprep.subr.bf16.mxu0 0
    %1698 = vmatpush1.bf16.msra.mxu0 0
    %1699 = vmatprep.subr.bf16.mxu0 0
    %1700 = vmatpush1.bf16.msra.mxu0 0
    %1701 = vmatprep.subr.bf16.mxu0 0
    %1702 = vmatpush1.bf16.msra.mxu0 0
    %1703 = vmatprep.mubr.bf16.mxu0 0
    %1704 = vmatmul.mubr.bf16.gmra.mrb[0].mxu0 %v1599
    %v1705 = vpop.f32.mrb[0].mxu0
    %v1706 = vadd.f32 %v1621, %v1705
    %v1707 = vpop.f32.mrb[0].mxu0
    %v1708 = vpop.f32.mrb[0].mxu0
    %v1709 = vpop.f32.mrb[0].mxu0
    %1710 = vdwg.mxu0
    %v1711 = vmax.f32 %v1706, 0.0
    %v1712 = vpack.c.bf16 %v1711, %v1711
    %v1713 = vld [vmem:[#allocation13] sm:$0xf]
    %v1714 = vld [vmem:[#allocation13 + $0x4] sm:$0xf]
    %v1715 = vld [vmem:[#allocation13 + $0x8] sm:$0xf]
    %v1716 = vld [vmem:[#allocation13 + $0xc] sm:$0xf]
    %v1717 = vld [vmem:[#allocation13 + $0x10] sm:$0xf]
    %v1718 = vld [vmem:[#allocation13 + $0x14] sm:$0xf]
    %v1719 = vld [vmem:[#allocation13 + $0x18] sm:$0xf]
    %v1720 = vld [vmem:[#allocation13 + $0x1c] sm:$0xf]
    %v1721 = vld [vmem:[#allocation13 + $0x20] sm:$0xf]
    %v1722 = vld [vmem:[#allocation13 + $0x24] sm:$0xf]
    %v1723 = vld [vmem:[#allocation13 + $0x28] sm:$0xf]
    %v1724 = vld [vmem:[#allocation13 + $0x2c] sm:$0xf]
    %v1725 = vld [vmem:[#allocation13 + $0x30] sm:$0xf]
    %v1726 = vld [vmem:[#allocation13 + $0x34] sm:$0xf]
    %v1727 = vld [vmem:[#allocation13 + $0x38] sm:$0xf]
    %v1728 = vld [vmem:[#allocation13 + $0x3c] sm:$0xf]
    %v1729 = vld [vmem:[%s12] sm:$0x1]
    %v1731 = vlaneseq
    %v1732 = vshrl.u32 %v1731, 7
    %v1733 = vsub.s32 0, %v1732
    %v1734 = vrot.slane %v1729, %v1733
    %v1752 = vunpack.c.l.b16 %v1713
    %v1753 = vunpack.c.l.b16 %v1714
    %v1754 = vunpack.c.l.b16 %v1715
    %v1755 = vunpack.c.l.b16 %v1716
    %v1756 = vunpack.c.l.b16 %v1717
    %v1757 = vunpack.c.l.b16 %v1718
    %v1758 = vunpack.c.l.b16 %v1719
    %v1759 = vunpack.c.l.b16 %v1720
    %v1760 = vunpack.c.l.b16 %v1721
    %v1761 = vunpack.c.l.b16 %v1722
    %v1762 = vunpack.c.l.b16 %v1723
    %v1763 = vunpack.c.l.b16 %v1724
    %v1764 = vunpack.c.l.b16 %v1725
    %v1765 = vunpack.c.l.b16 %v1726
    %v1766 = vunpack.c.l.b16 %v1727
    %v1767 = vunpack.c.l.b16 %v1728
    %v1768 = vpack.c.b16 %v1753, %v1752
    %v1769 = vpack.c.b16 %v1755, %v1754
    %v1770 = vpack.c.b16 %v1757, %v1756
    %v1771 = vpack.c.b16 %v1759, %v1758
    %v1772 = vpack.c.b16 %v1761, %v1760
    %v1773 = vpack.c.b16 %v1763, %v1762
    %v1774 = vpack.c.b16 %v1765, %v1764
    %v1775 = vpack.c.b16 %v1767, %v1766
    %1784 = vmatprep.subr.bf16.mxu0 0
    %1785 = vmatpush1.bf16.msra.mxu0 %v1768
    %1786 = vmatprep.subr.bf16.mxu0 0
    %1787 = vmatpush1.bf16.msra.mxu0 %v1769
    %1788 = vmatprep.subr.bf16.mxu0 0
    %1789 = vmatpush1.bf16.msra.mxu0 %v1770
    %1790 = vmatprep.subr.bf16.mxu0 0
    %1791 = vmatpush1.bf16.msra.mxu0 %v1771
    %1792 = vmatprep.subr.bf16.mxu0 0
    %1793 = vmatpush1.bf16.msra.mxu0 %v1772
    %1794 = vmatprep.subr.bf16.mxu0 0
    %1795 = vmatpush1.bf16.msra.mxu0 %v1773
    %1796 = vmatprep.subr.bf16.mxu0 0
    %1797 = vmatpush1.bf16.msra.mxu0 %v1774
    %1798 = vmatprep.subr.bf16.mxu0 0
    %1799 = vmatpush1.bf16.msra.mxu0 %v1775
    %1800 = vmatprep.subr.bf16.mxu0 0
    %1801 = vmatpush1.bf16.msra.mxu0 0
    %1802 = vmatprep.subr.bf16.mxu0 0
    %1803 = vmatpush1.bf16.msra.mxu0 0
    %1804 = vmatprep.subr.bf16.mxu0 0
    %1805 = vmatpush1.bf16.msra.mxu0 0
    %1806 = vmatprep.subr.bf16.mxu0 0
    %1807 = vmatpush1.bf16.msra.mxu0 0
    %1808 = vmatprep.subr.bf16.mxu0 0
    %1809 = vmatpush1.bf16.msra.mxu0 0
    %1810 = vmatprep.subr.bf16.mxu0 0
    %1811 = vmatpush1.bf16.msra.mxu0 0
    %1812 = vmatprep.subr.bf16.mxu0 0
    %1813 = vmatpush1.bf16.msra.mxu0 0
    %1814 = vmatprep.subr.bf16.mxu0 0
    %1815 = vmatpush1.bf16.msra.mxu0 0
    %1816 = vmatprep.mubr.bf16.mxu0 0
    %1817 = vmatmul.mubr.bf16.gmra.mrb[0].mxu0 %v1712
    %v1818 = vpop.f32.mrb[0].mxu0
    %v1819 = vadd.f32 %v1734, %v1818
    %v1820 = vpop.f32.mrb[0].mxu0
    %v1821 = vpop.f32.mrb[0].mxu0
    %v1822 = vpop.f32.mrb[0].mxu0
    %1823 = vdwg.mxu0
    %v1824 = vlaneseq
    %v1825 = vand.u32 %v1824, 127
    %vm1826 = vcmp.lt.s32.totalorder %v1825, 10
    %v1827 = vsel %vm1826, %v1819, -1e+30
    %1828 = vmax.xlane.f32.xlu0 %v1827
    %v1829 = vpop.xlane.xlu0 %1828
    %v1830 = vsub.f32 %v1827, %v1829
    %v1831 = vmul.f32 %v1830, 1.442695
    %v1832 = vpow.pop %v1831
    %1833 = vadd.xlane.f32.xlu0 %v1832
    %v1834 = vpop.xlane.xlu0 %1833
    %v1835 = vlog2.pop %v1834
    %v1836 = vmul.f32 %v1835, 0.6931472
    %v1837 = vadd.f32 %v1829, %v1836
    %v1838 = vsub.f32 %v1827, %v1837
    %v1839 = vpack.c.bf16 %v1838, %v1838
    %1840 = vst [vmem:[#allocation14] sm:$0xf] %v1839
    // Predicated region
    $region82: #{tpu_custom_call.1} parent=1 // pred_check
      _
    $region83: #{tpu_custom_call.1} parent=1 // pred_check_branch
      %1842 = sbr.rel (0) target = $region85
    $region84: #{tpu_custom_call.1} parent=1 // pred_region
      %s1844 = ssub.s32 64, 64
      %1845 = vsyncadd [#allocation4], %s1844
      %s1847 = sshll.u32 [#allocation14], 4
      %s1848 = int_to_ptr.vmem [resolvable:$true] %s1847
      %1850 = dma.vmem_to_hbm [thread:$0]  %s1848, 64, %s13, [#allocation4]
    $region85: #{tpu_custom_call.1} parent=1 // pred_fallthru
      _
    // Predicated region
    $region86: #{tpu_custom_call.1} parent=1 // pred_check
      _
    $region87: #{tpu_custom_call.1} parent=1 // pred_check_branch
      %1852 = sbr.rel (0) target = $region89
    $region88: #{tpu_custom_call.1} parent=1 // pred_region
      %1853 = dma.done [#allocation4], 64
    $region89: #{tpu_custom_call.1} parent=1 // pred_fallthru
      _
    %1854 = vsyncpa [#allocation3], 1
    %1855 = vsyncpa [#allocation6], 1
    %1856 = vsyncpa [#allocation9], 1
    %1857 = vsyncpa [#allocation12], 1
    %1858 = vsyncpa [#allocation4], 1

</llo_original>
